<compile_context>
chip_gen: v7x
topology: tpu7x:2x2x1
jax: 0.10.0
libtpu: 0.0.40
codegen_flags: <defaults>
</compile_context>

<pallas_src>
import math

import numpy as np
import jax
import jax.numpy as jnp
from jax.experimental import pallas as pl
from jax.experimental.pallas import tpu as pltpu

LN_EPS = 1e-6  # BERT-pytorch LayerNorm: a_2*(x-mean)/(std+eps)+b_2, std with ddof=1


def _layernorm(x, g, b):
    mean = jnp.mean(x, axis=-1, keepdims=True)
    diff = x - mean
    var = jnp.sum(diff * diff, axis=-1, keepdims=True) * (1.0 / (x.shape[-1] - 1))
    inv = pl.reciprocal(jnp.sqrt(var) + LN_EPS, approx=True)   # EUP, not VPU divide
    return g * diff * inv + b


def _gelu(x):
    # BERT-pytorch GELU (tanh approximation)
    return 0.5 * x * (1.0 + jnp.tanh(math.sqrt(2.0 / math.pi) * (x + 0.044715 * x * x * x)))


# ----------------------------------------------------------------------------
# Fused transformer stack kernel.
# grid = (L,).  The activation slab (M, H) with M = S*B (s-major: rows [0, B)
# are position 0, rows [B, 2B) are position 1) is resident across the layer
# axis in o_ref (accumulator pattern).
#   x' = x  + MHA(LN(x))          (SublayerConnection 1, dropout = identity)
#   y  = x' + FFN(LN(x'))         (SublayerConnection 2, dropout = identity)
# ----------------------------------------------------------------------------
def _bert_stack_kernel(x_ref, bd_ref,
                       ln1g_ref, ln1b_ref,
                       wq_ref, bq_ref, wk_ref, bk_ref, wv_ref, bv_ref,
                       wo_ref, bo_ref,
                       ln2g_ref, ln2b_ref,
                       w1_ref, b1_ref, w2_ref, b2_ref,
                       o_ref):
    layer = pl.program_id(0)

    @pl.when(layer == 0)
    def _():
        o_ref[...] = x_ref[...]                      # seed the residual stream

    M, H = o_ref.shape                               # M = S*B, s-major; S == 2
    B = M // 2

    x = o_ref[...].astype(jnp.float32)

    # ---- sublayer 1: multi-head self-attention (mask is None) ----
    h = _layernorm(x, ln1g_ref[0], ln1b_ref[0]).astype(jnp.bfloat16)
    q = jnp.dot(h, wq_ref[0], preferred_element_type=jnp.float32) + bq_ref[0]
    k = jnp.dot(h, wk_ref[0], preferred_element_type=jnp.float32) + bk_ref[0]
    v = jnp.dot(h, wv_ref[0], preferred_element_type=jnp.float32) + bv_ref[0]

    # S == 2: the "other" sequence position is the opposite half of the rows.
    k_swap = jnp.concatenate([k[B:, :], k[:B, :]], axis=0)
    v_swap = jnp.concatenate([v[B:, :], v[:B, :]], axis=0)

    # Per-head scores: elementwise q*k then a matmul against the block-diagonal
    # head-sum matrix (scale 1/sqrt(dh) folded in), which both reduces over each
    # head's dh lanes and broadcasts the score back across them.
    bd = bd_ref[...]
    s_same = jnp.dot(q * k, bd, preferred_element_type=jnp.float32)        # q_i . k_i
    s_cross = jnp.dot(q * k_swap, bd, preferred_element_type=jnp.float32)  # q_i . k_{1-i}

    m = jnp.maximum(s_same, s_cross)
    p_same = jnp.exp(s_same - m)
    p_cross = jnp.exp(s_cross - m)
    inv = pl.reciprocal(p_same + p_cross, approx=True)
    ctx = (p_same * inv) * v + (p_cross * inv) * v_swap                     # (M, H)

    attn = jnp.dot(ctx.astype(jnp.bfloat16), wo_ref[0],
                   preferred_element_type=jnp.float32) + bo_ref[0]
    x1 = x + attn

    # ---- sublayer 2: position-wise feed-forward (GELU) ----
    h2 = _layernorm(x1, ln2g_ref[0], ln2b_ref[0]).astype(jnp.bfloat16)
    u = jnp.dot(h2, w1_ref[0], preferred_element_type=jnp.float32) + b1_ref[0]
    u = _gelu(u).astype(jnp.bfloat16)
    f = jnp.dot(u, w2_ref[0], preferred_element_type=jnp.float32) + b2_ref[0]
    o_ref[...] = (x1 + f).astype(o_ref.dtype)        # final block dropout = identity


def _vmem_limit_bytes():
    # 3/4 of physical VMEM, clamped: ~48 MiB on v7x (64 MiB/TC), ~96 MiB on v5e/v6e.
    try:
        cap = int(pltpu.get_tpu_info().vmem_capacity_bytes)
    except Exception:
        cap = 64 * 1024 * 1024
    return min(max(cap * 3 // 4, 48 * 1024 * 1024), 100 * 1024 * 1024)


def bert_stack(x, params, n_heads):
    B, S, H = x.shape
    assert S == 2, "module's view(...) -> Linear(2*hidden, 3000) forces seq_len == 2"
    L = params["wq"].shape[0]
    M = B * S
    dh = H // n_heads

    # s-major flattening: rows [0,B) are position 0, rows [B,2B) are position 1,
    # so the in-kernel sequence swap is a simple half/half row swap.
    xs = jnp.transpose(x, (1, 0, 2)).reshape(M, H)

    # Block-diagonal head-sum matrix with the attention scale folded in.
    head = np.arange(H) // dh
    bd = jnp.asarray((head[:, None] == head[None, :]).astype(np.float32)
                     * (1.0 / math.sqrt(dh)))

    names = ["ln1_g", "ln1_b",
             "wq", "bq", "wk", "bk", "wv", "bv", "wo", "bo",
             "ln2_g", "ln2_b",
             "w1", "b1", "w2", "b2"]
    weights = [params[n] for n in names]

    def wspec(w):
        # stacked as (L, ...); stream one layer's slab per grid step
        return pl.BlockSpec((1,) + w.shape[1:],
                            lambda l, _n=w.ndim - 1: (l,) + (0,) * _n)

    return pl.pallas_call(
        _bert_stack_kernel,
        out_shape=jax.ShapeDtypeStruct((M, H), jnp.float32),
        grid=(L,),
        in_specs=[pl.BlockSpec((M, H), lambda l: (0, 0)),    # activations (loaded once)
                  pl.BlockSpec((H, H), lambda l: (0, 0))]    # head-sum matrix (loaded once)
                 + [wspec(w) for w in weights],
        out_specs=pl.BlockSpec((M, H), lambda l: (0, 0)),
        compiler_params=pltpu.CompilerParams(
            dimension_semantics=("arbitrary",),
            vmem_limit_bytes=_vmem_limit_bytes()),
    )(xs, bd, *weights)                                      # (S*B, H), s-major


# ----------------------------------------------------------------------------
# Final linear mapping: (B, 2H) @ (2H, 3000) + (1, 3000)
# Lane-dense 1024-wide output tiles (N padded to 3072); x cast to bf16 once.
# ----------------------------------------------------------------------------
def _final_linear_kernel(x_ref, w_ref, b_ref, o_ref):
    acc = jnp.dot(x_ref[...], w_ref[...], preferred_element_type=jnp.float32)
    o_ref[...] = (acc + b_ref[...]).astype(o_ref.dtype)


def final_linear(x2, w, b, *, tn=1024):
    B, K = x2.shape
    N = w.shape[1]
    n_pad = pl.cdiv(N, tn) * tn
    if n_pad != N:
        w = jnp.pad(w, ((0, 0), (0, n_pad - N)))
        b = jnp.pad(b, ((0, 0), (0, n_pad - N)))
    x2 = x2.astype(jnp.bfloat16)                     # cast once, not per grid step
    out = pl.pallas_call(
        _final_linear_kernel,
        out_shape=jax.ShapeDtypeStruct((B, n_pad), jnp.float32),
        grid=(n_pad // tn,),
        in_specs=[pl.BlockSpec((B, K), lambda j: (0, 0)),
                  pl.BlockSpec((K, tn), lambda j: (0, j)),
                  pl.BlockSpec((1, tn), lambda j: (0, j))],
        out_specs=pl.BlockSpec((B, tn), lambda j: (0, j)),
        compiler_params=pltpu.CompilerParams(
            dimension_semantics=("parallel",)),
    )(x2, w, b)
    return out[:, :N]


# ----------------------------------------------------------------------------
# Parameter init (deterministic, PyTorch nn.Linear-style uniform init).
# Matmul weights stored bf16 (stacked over layers); biases / LN params f32.
# ----------------------------------------------------------------------------
def _linear_init(key, fan_in, fan_out):
    bound = 1.0 / math.sqrt(fan_in)
    kw, kb = jax.random.split(key)
    w = jax.random.uniform(kw, (fan_in, fan_out), jnp.float32, -bound, bound)
    b = jax.random.uniform(kb, (1, fan_out), jnp.float32, -bound, bound)
    return w.astype(jnp.bfloat16), b   # stored (in, out) = torch weight.T


def init_params(key, hidden, n_layers, n_heads, out_dim=3000):
    keys = jax.random.split(key, n_layers + 1)
    per_layer = []
    for l in range(n_layers):
        ks = jax.random.split(keys[l], 6)
        wq, bq = _linear_init(ks[0], hidden, hidden)
        wk, bk = _linear_init(ks[1], hidden, hidden)
        wv, bv = _linear_init(ks[2], hidden, hidden)
        wo, bo = _linear_init(ks[3], hidden, hidden)
        w1, b1 = _linear_init(ks[4], hidden, 4 * hidden)
        w2, b2 = _linear_init(ks[5], 4 * hidden, hidden)
        per_layer.append(dict(
            ln1_g=jnp.ones((1, hidden), jnp.float32),
            ln1_b=jnp.zeros((1, hidden), jnp.float32),
            ln2_g=jnp.ones((1, hidden), jnp.float32),
            ln2_b=jnp.zeros((1, hidden), jnp.float32),
            wq=wq, bq=bq, wk=wk, bk=bk, wv=wv, bv=bv, wo=wo, bo=bo,
            w1=w1, b1=b1, w2=w2, b2=b2))
    # stack every parameter along a leading layer axis
    stacked = {k: jnp.stack([p[k] for p in per_layer], axis=0)
               for k in per_layer[0].keys()}
    wm, bm = _linear_init(keys[-1], 2 * hidden, out_dim)
    return stacked, wm, bm


def bert_forward(x, params, wm, bm, n_heads):
    B, S, H = x.shape
    y = bert_stack(x, params, n_heads)                       # (S*B, H), s-major
    y = y.reshape(S, B, H).transpose(1, 0, 2).reshape(B, S * H)  # == x.view(B, S*H)
    return final_linear(y, wm, bm)


# ----------------------------------------------------------------------------
# Pure-JAX reference (same bf16-stored weights, f32 math) for correctness check.
# ----------------------------------------------------------------------------
def bert_reference(x, params, wm, bm, n_heads):
    f32 = lambda a: a.astype(jnp.float32)
    L = params["wq"].shape[0]

    def ln(t, g, b):
        mean = jnp.mean(t, -1, keepdims=True)
        var = jnp.sum((t - mean) ** 2, -1, keepdims=True) / (t.shape[-1] - 1)
        return g * (t - mean) / (jnp.sqrt(var) + LN_EPS) + b

    for l in range(L):
        B, S, H = x.shape
        dh = H // n_heads
        h = ln(x, f32(params["ln1_g"][l]), f32(params["ln1_b"][l]))
        q = h @ f32(params["wq"][l]) + f32(params["bq"][l])
        k = h @ f32(params["wk"][l]) + f32(params["bk"][l])
        v = h @ f32(params["wv"][l]) + f32(params["bv"][l])
        qh = q.reshape(B, S, n_heads, dh).transpose(0, 2, 1, 3)
        kh = k.reshape(B, S, n_heads, dh).transpose(0, 2, 1, 3)
        vh = v.reshape(B, S, n_heads, dh).transpose(0, 2, 1, 3)
        s = jnp.einsum('bhqd,bhkd->bhqk', qh, kh) / math.sqrt(dh)
        a = jnp.einsum('bhqk,bhkd->bhqd', jax.nn.softmax(s, axis=-1), vh)
        a = a.transpose(0, 2, 1, 3).reshape(B, S, H) @ f32(params["wo"][l]) + f32(params["bo"][l])
        x = x + a
        h2 = ln(x, f32(params["ln2_g"][l]), f32(params["ln2_b"][l]))
        x = x + (_gelu(h2 @ f32(params["w1"][l]) + f32(params["b1"][l]))
                 @ f32(params["w2"][l]) + f32(params["b2"][l]))
    B, S, H = x.shape
    return x.reshape(B, S * H) @ f32(wm) + f32(bm)


if __name__ == "__main__":
    hidden, n_layers, n_heads = 64, 3, 4     # small stand-ins for 768 / 12 / 12
    B, S = 2, 2                              # S must be 2 (view -> Linear(2*hidden, 3000))
    out_dim = 3000

    key = jax.random.PRNGKey(0)
    kx, kp = jax.random.split(key)
    x = jax.random.normal(kx, (B, S, hidden), jnp.float32)
    params, wm, bm = init_params(kp, hidden, n_layers, n_heads, out_dim=out_dim)

    out = bert_forward(x, params, wm, bm, n_heads)
    out = jax.block_until_ready(out)
    assert out.shape == (B, out_dim)

    with jax.default_matmul_precision("highest"):
        ref = bert_reference(x, params, wm, bm, n_heads)
    # bf16 matmul operands vs f32 reference -> loose-ish tolerance
    np.testing.assert_allclose(np.asarray(out), np.asarray(ref), rtol=5e-2, atol=5e-2)

    print("KERNEL_OK")
</pallas_src>

<mosaic_0001>
module attributes {stable_mosaic.version = 11 : i64} {
  func.func @_bert_stack_kernel(%arg0: i32, %arg1: memref<4x64xf32, #tpu.memory_space<vmem>>, %arg2: memref<64x64xf32, #tpu.memory_space<vmem>>, %arg3: memref<1x1x64xf32, #tpu.memory_space<vmem>>, %arg4: memref<1x1x64xf32, #tpu.memory_space<vmem>>, %arg5: memref<1x64x64xbf16, #tpu.memory_space<vmem>>, %arg6: memref<1x1x64xf32, #tpu.memory_space<vmem>>, %arg7: memref<1x64x64xbf16, #tpu.memory_space<vmem>>, %arg8: memref<1x1x64xf32, #tpu.memory_space<vmem>>, %arg9: memref<1x64x64xbf16, #tpu.memory_space<vmem>>, %arg10: memref<1x1x64xf32, #tpu.memory_space<vmem>>, %arg11: memref<1x64x64xbf16, #tpu.memory_space<vmem>>, %arg12: memref<1x1x64xf32, #tpu.memory_space<vmem>>, %arg13: memref<1x1x64xf32, #tpu.memory_space<vmem>>, %arg14: memref<1x1x64xf32, #tpu.memory_space<vmem>>, %arg15: memref<1x64x256xbf16, #tpu.memory_space<vmem>>, %arg16: memref<1x1x256xf32, #tpu.memory_space<vmem>>, %arg17: memref<1x256x64xbf16, #tpu.memory_space<vmem>>, %arg18: memref<1x1x64xf32, #tpu.memory_space<vmem>>, %arg19: memref<4x64xf32, #tpu.memory_space<vmem>>) attributes {dimension_semantics = [#tpu.dimension_semantics<arbitrary>], iteration_bounds = array<i64: 3>, scalar_prefetch = 0 : i64, scratch_operands = 0 : i64, tpu.core_type = #tpu.core_type<tc>, window_params = [{pipeline_mode = #tpu.pipeline_mode<synchronous>, transform_indices = @transform_0, window_bounds = array<i64: 4, 64>}, {pipeline_mode = #tpu.pipeline_mode<synchronous>, transform_indices = @transform_1, window_bounds = array<i64: 64, 64>}, {transform_indices = @transform_2, window_bounds = array<i64: 1, 1, 64>}, {transform_indices = @transform_3, window_bounds = array<i64: 1, 1, 64>}, {transform_indices = @transform_4, window_bounds = array<i64: 1, 64, 64>}, {transform_indices = @transform_5, window_bounds = array<i64: 1, 1, 64>}, {transform_indices = @transform_6, window_bounds = array<i64: 1, 64, 64>}, {transform_indices = @transform_7, window_bounds = array<i64: 1, 1, 64>}, {transform_indices = @transform_8, window_bounds = array<i64: 1, 64, 64>}, {transform_indices = @transform_9, window_bounds = array<i64: 1, 1, 64>}, {transform_indices = @transform_10, window_bounds = array<i64: 1, 64, 64>}, {transform_indices = @transform_11, window_bounds = array<i64: 1, 1, 64>}, {transform_indices = @transform_12, window_bounds = array<i64: 1, 1, 64>}, {transform_indices = @transform_13, window_bounds = array<i64: 1, 1, 64>}, {transform_indices = @transform_14, window_bounds = array<i64: 1, 64, 256>}, {transform_indices = @transform_15, window_bounds = array<i64: 1, 1, 256>}, {transform_indices = @transform_16, window_bounds = array<i64: 1, 256, 64>}, {transform_indices = @transform_17, window_bounds = array<i64: 1, 1, 64>}, {pipeline_mode = #tpu.pipeline_mode<synchronous>, transform_indices = @transform_18, window_bounds = array<i64: 4, 64>}]} {
    %c0_i32 = arith.constant 0 : i32
    %0 = arith.cmpi eq, %arg0, %c0_i32 : i32
    %1 = arith.extui %0 : i1 to i32
    %c0_i32_0 = arith.constant 0 : i32
    %2 = arith.cmpi ne, %1, %c0_i32_0 : i32
    scf.if %2 {
      %c0_75 = arith.constant 0 : index
      %c0_76 = arith.constant 0 : index
      %139 = vector.load %arg1[%c0_75, %c0_76] : memref<4x64xf32, #tpu.memory_space<vmem>>, vector<4x64xf32>
      %c0_77 = arith.constant 0 : index
      %c0_78 = arith.constant 0 : index
      %140 = vector.load %arg19[%c0_77, %c0_78] : memref<4x64xf32, #tpu.memory_space<vmem>>, vector<4x64xf32>
      tpu.vector_store %arg19[%c0_77, %c0_78], %139 {strides = array<i32>} : memref<4x64xf32, #tpu.memory_space<vmem>>, vector<4x64xf32>,
    } else {
    }
    %c0 = arith.constant 0 : index
    %c0_1 = arith.constant 0 : index
    %3 = vector.load %arg19[%c0, %c0_1] : memref<4x64xf32, #tpu.memory_space<vmem>>, vector<4x64xf32>
    %c0_2 = arith.constant 0 : index
    %c0_3 = arith.constant 0 : index
    %c0_4 = arith.constant 0 : index
    %4 = vector.load %arg3[%c0_2, %c0_3, %c0_4] : memref<1x1x64xf32, #tpu.memory_space<vmem>>, vector<1x1x64xf32>
    %5 = vector.shape_cast %4 : vector<1x1x64xf32> to vector<1x64xf32>
    %c0_5 = arith.constant 0 : index
    %c0_6 = arith.constant 0 : index
    %c0_7 = arith.constant 0 : index
    %6 = vector.load %arg4[%c0_5, %c0_6, %c0_7] : memref<1x1x64xf32, #tpu.memory_space<vmem>>, vector<1x1x64xf32>
    %7 = vector.shape_cast %6 : vector<1x1x64xf32> to vector<1x64xf32>
    %cst = arith.constant dense<0.000000e+00> : vector<4xf32>
    %8 = vector.multi_reduction <add>, %3, %cst [1] : vector<4x64xf32> to vector<4xf32>
    %9 = vector.shape_cast %8 : vector<4xf32> to vector<4x1xf32>
    %cst_8 = arith.constant 6.400000e+01 : f32
    %10 = vector.broadcast %cst_8 : f32 to vector<4x1xf32>
    %11 = arith.divf %9, %10 : vector<4x1xf32>
    %12 = vector.broadcast %11 : vector<4x1xf32> to vector<4x64xf32>
    %13 = arith.subf %3, %12 : vector<4x64xf32>
    %14 = arith.mulf %13, %13 : vector<4x64xf32>
    %cst_9 = arith.constant dense<0.000000e+00> : vector<4xf32>
    %15 = vector.multi_reduction <add>, %14, %cst_9 [1] : vector<4x64xf32> to vector<4xf32>
    %16 = vector.shape_cast %15 : vector<4xf32> to vector<4x1xf32>
    %cst_10 = arith.constant 0.0158730168 : f32
    %17 = vector.broadcast %cst_10 : f32 to vector<4x1xf32>
    %18 = arith.mulf %16, %17 : vector<4x1xf32>
    %19 = math.sqrt %18 : vector<4x1xf32>
    %cst_11 = arith.constant 9.99999997E-7 : f32
    %20 = vector.broadcast %cst_11 : f32 to vector<4x1xf32>
    %21 = arith.addf %19, %20 : vector<4x1xf32>
    %22 = tpu.reciprocal %21 {approx = true} : vector<4x1xf32> -> vector<4x1xf32>
    %23 = vector.broadcast %5 : vector<1x64xf32> to vector<4x64xf32>
    %24 = arith.mulf %23, %13 : vector<4x64xf32>
    %25 = vector.broadcast %22 : vector<4x1xf32> to vector<4x64xf32>
    %26 = arith.mulf %24, %25 : vector<4x64xf32>
    %27 = vector.broadcast %7 : vector<1x64xf32> to vector<4x64xf32>
    %28 = arith.addf %26, %27 : vector<4x64xf32>
    %29 = arith.truncf %28 : vector<4x64xf32> to vector<4x64xbf16>
    %c0_12 = arith.constant 0 : index
    %c0_13 = arith.constant 0 : index
    %c0_14 = arith.constant 0 : index
    %30 = vector.load %arg5[%c0_12, %c0_13, %c0_14] : memref<1x64x64xbf16, #tpu.memory_space<vmem>>, vector<1x64x64xbf16>
    %31 = vector.shape_cast %30 : vector<1x64x64xbf16> to vector<64x64xbf16>
    %cst_15 = arith.constant dense<0.000000e+00> : vector<4x64xf32>
    %32 = tpu.matmul %29, %31, %cst_15 {dimension_numbers = #tpu.dot_dimension_numbers<[1], [0], [0], [1], [0, 0, 1, 1], [], []>} : vector<4x64xbf16>, vector<64x64xbf16>, vector<4x64xf32> -> vector<4x64xf32>
    %c0_16 = arith.constant 0 : index
    %c0_17 = arith.constant 0 : index
    %c0_18 = arith.constant 0 : index
    %33 = vector.load %arg6[%c0_16, %c0_17, %c0_18] : memref<1x1x64xf32, #tpu.memory_space<vmem>>, vector<1x1x64xf32>
    %34 = vector.shape_cast %33 : vector<1x1x64xf32> to vector<1x64xf32>
    %35 = vector.broadcast %34 : vector<1x64xf32> to vector<4x64xf32>
    %36 = arith.addf %32, %35 : vector<4x64xf32>
    %c0_19 = arith.constant 0 : index
    %c0_20 = arith.constant 0 : index
    %c0_21 = arith.constant 0 : index
    %37 = vector.load %arg7[%c0_19, %c0_20, %c0_21] : memref<1x64x64xbf16, #tpu.memory_space<vmem>>, vector<1x64x64xbf16>
    %38 = vector.shape_cast %37 : vector<1x64x64xbf16> to vector<64x64xbf16>
    %cst_22 = arith.constant dense<0.000000e+00> : vector<4x64xf32>
    %39 = tpu.matmul %29, %38, %cst_22 {dimension_numbers = #tpu.dot_dimension_numbers<[1], [0], [0], [1], [0, 0, 1, 1], [], []>} : vector<4x64xbf16>, vector<64x64xbf16>, vector<4x64xf32> -> vector<4x64xf32>
    %c0_23 = arith.constant 0 : index
    %c0_24 = arith.constant 0 : index
    %c0_25 = arith.constant 0 : index
    %40 = vector.load %arg8[%c0_23, %c0_24, %c0_25] : memref<1x1x64xf32, #tpu.memory_space<vmem>>, vector<1x1x64xf32>
    %41 = vector.shape_cast %40 : vector<1x1x64xf32> to vector<1x64xf32>
    %42 = vector.broadcast %41 : vector<1x64xf32> to vector<4x64xf32>
    %43 = arith.addf %39, %42 : vector<4x64xf32>
    %c0_26 = arith.constant 0 : index
    %c0_27 = arith.constant 0 : index
    %c0_28 = arith.constant 0 : index
    %44 = vector.load %arg9[%c0_26, %c0_27, %c0_28] : memref<1x64x64xbf16, #tpu.memory_space<vmem>>, vector<1x64x64xbf16>
    %45 = vector.shape_cast %44 : vector<1x64x64xbf16> to vector<64x64xbf16>
    %cst_29 = arith.constant dense<0.000000e+00> : vector<4x64xf32>
    %46 = tpu.matmul %29, %45, %cst_29 {dimension_numbers = #tpu.dot_dimension_numbers<[1], [0], [0], [1], [0, 0, 1, 1], [], []>} : vector<4x64xbf16>, vector<64x64xbf16>, vector<4x64xf32> -> vector<4x64xf32>
    %c0_30 = arith.constant 0 : index
    %c0_31 = arith.constant 0 : index
    %c0_32 = arith.constant 0 : index
    %47 = vector.load %arg10[%c0_30, %c0_31, %c0_32] : memref<1x1x64xf32, #tpu.memory_space<vmem>>, vector<1x1x64xf32>
    %48 = vector.shape_cast %47 : vector<1x1x64xf32> to vector<1x64xf32>
    %49 = vector.broadcast %48 : vector<1x64xf32> to vector<4x64xf32>
    %50 = arith.addf %46, %49 : vector<4x64xf32>
    %51 = vector.extract_strided_slice %43 {offsets = [2, 0], sizes = [2, 64], strides = [1, 1]} : vector<4x64xf32> to vector<2x64xf32>
    %52 = vector.extract_strided_slice %43 {offsets = [0, 0], sizes = [2, 64], strides = [1, 1]} : vector<4x64xf32> to vector<2x64xf32>
    %53 = tpu.concatenate %51, %52 in 0 : vector<2x64xf32>, vector<2x64xf32> -> vector<4x64xf32>
    %54 = vector.extract_strided_slice %50 {offsets = [2, 0], sizes = [2, 64], strides = [1, 1]} : vector<4x64xf32> to vector<2x64xf32>
    %55 = vector.extract_strided_slice %50 {offsets = [0, 0], sizes = [2, 64], strides = [1, 1]} : vector<4x64xf32> to vector<2x64xf32>
    %56 = tpu.concatenate %54, %55 in 0 : vector<2x64xf32>, vector<2x64xf32> -> vector<4x64xf32>
    %c0_33 = arith.constant 0 : index
    %c0_34 = arith.constant 0 : index
    %57 = vector.load %arg2[%c0_33, %c0_34] : memref<64x64xf32, #tpu.memory_space<vmem>>, vector<64x64xf32>
    %58 = arith.mulf %36, %43 : vector<4x64xf32>
    %cst_35 = arith.constant dense<0.000000e+00> : vector<4x64xf32>
    %59 = tpu.matmul %58, %57, %cst_35 {dimension_numbers = #tpu.dot_dimension_numbers<[1], [0], [0], [1], [0, 0, 1, 1], [], []>} : vector<4x64xf32>, vector<64x64xf32>, vector<4x64xf32> -> vector<4x64xf32>
    %60 = arith.mulf %36, %53 : vector<4x64xf32>
    %cst_36 = arith.constant dense<0.000000e+00> : vector<4x64xf32>
    %61 = tpu.matmul %60, %57, %cst_36 {dimension_numbers = #tpu.dot_dimension_numbers<[1], [0], [0], [1], [0, 0, 1, 1], [], []>} : vector<4x64xf32>, vector<64x64xf32>, vector<4x64xf32> -> vector<4x64xf32>
    %62 = arith.maximumf %59, %61 : vector<4x64xf32>
    %63 = arith.subf %59, %62 : vector<4x64xf32>
    %64 = math.exp %63 : vector<4x64xf32>
    %65 = arith.subf %61, %62 : vector<4x64xf32>
    %66 = math.exp %65 : vector<4x64xf32>
    %67 = arith.addf %64, %66 : vector<4x64xf32>
    %68 = tpu.reciprocal %67 {approx = true} : vector<4x64xf32> -> vector<4x64xf32>
    %69 = arith.mulf %64, %68 : vector<4x64xf32>
    %70 = arith.mulf %69, %50 : vector<4x64xf32>
    %71 = arith.mulf %66, %68 : vector<4x64xf32>
    %72 = arith.mulf %71, %56 : vector<4x64xf32>
    %73 = arith.addf %70, %72 : vector<4x64xf32>
    %74 = arith.truncf %73 : vector<4x64xf32> to vector<4x64xbf16>
    %c0_37 = arith.constant 0 : index
    %c0_38 = arith.constant 0 : index
    %c0_39 = arith.constant 0 : index
    %75 = vector.load %arg11[%c0_37, %c0_38, %c0_39] : memref<1x64x64xbf16, #tpu.memory_space<vmem>>, vector<1x64x64xbf16>
    %76 = vector.shape_cast %75 : vector<1x64x64xbf16> to vector<64x64xbf16>
    %cst_40 = arith.constant dense<0.000000e+00> : vector<4x64xf32>
    %77 = tpu.matmul %74, %76, %cst_40 {dimension_numbers = #tpu.dot_dimension_numbers<[1], [0], [0], [1], [0, 0, 1, 1], [], []>} : vector<4x64xbf16>, vector<64x64xbf16>, vector<4x64xf32> -> vector<4x64xf32>
    %c0_41 = arith.constant 0 : index
    %c0_42 = arith.constant 0 : index
    %c0_43 = arith.constant 0 : index
    %78 = vector.load %arg12[%c0_41, %c0_42, %c0_43] : memref<1x1x64xf32, #tpu.memory_space<vmem>>, vector<1x1x64xf32>
    %79 = vector.shape_cast %78 : vector<1x1x64xf32> to vector<1x64xf32>
    %80 = vector.broadcast %79 : vector<1x64xf32> to vector<4x64xf32>
    %81 = arith.addf %77, %80 : vector<4x64xf32>
    %82 = arith.addf %3, %81 : vector<4x64xf32>
    %c0_44 = arith.constant 0 : index
    %c0_45 = arith.constant 0 : index
    %c0_46 = arith.constant 0 : index
    %83 = vector.load %arg13[%c0_44, %c0_45, %c0_46] : memref<1x1x64xf32, #tpu.memory_space<vmem>>, vector<1x1x64xf32>
    %84 = vector.shape_cast %83 : vector<1x1x64xf32> to vector<1x64xf32>
    %c0_47 = arith.constant 0 : index
    %c0_48 = arith.constant 0 : index
    %c0_49 = arith.constant 0 : index
    %85 = vector.load %arg14[%c0_47, %c0_48, %c0_49] : memref<1x1x64xf32, #tpu.memory_space<vmem>>, vector<1x1x64xf32>
    %86 = vector.shape_cast %85 : vector<1x1x64xf32> to vector<1x64xf32>
    %cst_50 = arith.constant dense<0.000000e+00> : vector<4xf32>
    %87 = vector.multi_reduction <add>, %82, %cst_50 [1] : vector<4x64xf32> to vector<4xf32>
    %88 = vector.shape_cast %87 : vector<4xf32> to vector<4x1xf32>
    %cst_51 = arith.constant 6.400000e+01 : f32
    %89 = vector.broadcast %cst_51 : f32 to vector<4x1xf32>
    %90 = arith.divf %88, %89 : vector<4x1xf32>
    %91 = vector.broadcast %90 : vector<4x1xf32> to vector<4x64xf32>
    %92 = arith.subf %82, %91 : vector<4x64xf32>
    %93 = arith.mulf %92, %92 : vector<4x64xf32>
    %cst_52 = arith.constant dense<0.000000e+00> : vector<4xf32>
    %94 = vector.multi_reduction <add>, %93, %cst_52 [1] : vector<4x64xf32> to vector<4xf32>
    %95 = vector.shape_cast %94 : vector<4xf32> to vector<4x1xf32>
    %cst_53 = arith.constant 0.0158730168 : f32
    %96 = vector.broadcast %cst_53 : f32 to vector<4x1xf32>
    %97 = arith.mulf %95, %96 : vector<4x1xf32>
    %98 = math.sqrt %97 : vector<4x1xf32>
    %cst_54 = arith.constant 9.99999997E-7 : f32
    %99 = vector.broadcast %cst_54 : f32 to vector<4x1xf32>
    %100 = arith.addf %98, %99 : vector<4x1xf32>
    %101 = tpu.reciprocal %100 {approx = true} : vector<4x1xf32> -> vector<4x1xf32>
    %102 = vector.broadcast %84 : vector<1x64xf32> to vector<4x64xf32>
    %103 = arith.mulf %102, %92 : vector<4x64xf32>
    %104 = vector.broadcast %101 : vector<4x1xf32> to vector<4x64xf32>
    %105 = arith.mulf %103, %104 : vector<4x64xf32>
    %106 = vector.broadcast %86 : vector<1x64xf32> to vector<4x64xf32>
    %107 = arith.addf %105, %106 : vector<4x64xf32>
    %108 = arith.truncf %107 : vector<4x64xf32> to vector<4x64xbf16>
    %c0_55 = arith.constant 0 : index
    %c0_56 = arith.constant 0 : index
    %c0_57 = arith.constant 0 : index
    %109 = vector.load %arg15[%c0_55, %c0_56, %c0_57] : memref<1x64x256xbf16, #tpu.memory_space<vmem>>, vector<1x64x256xbf16>
    %110 = vector.shape_cast %109 : vector<1x64x256xbf16> to vector<64x256xbf16>
    %cst_58 = arith.constant dense<0.000000e+00> : vector<4x256xf32>
    %111 = tpu.matmul %108, %110, %cst_58 {dimension_numbers = #tpu.dot_dimension_numbers<[1], [0], [0], [1], [0, 0, 1, 1], [], []>} : vector<4x64xbf16>, vector<64x256xbf16>, vector<4x256xf32> -> vector<4x256xf32>
    %c0_59 = arith.constant 0 : index
    %c0_60 = arith.constant 0 : index
    %c0_61 = arith.constant 0 : index
    %112 = vector.load %arg16[%c0_59, %c0_60, %c0_61] : memref<1x1x256xf32, #tpu.memory_space<vmem>>, vector<1x1x256xf32>
    %113 = vector.shape_cast %112 : vector<1x1x256xf32> to vector<1x256xf32>
    %114 = vector.broadcast %113 : vector<1x256xf32> to vector<4x256xf32>
    %115 = arith.addf %111, %114 : vector<4x256xf32>
    %cst_62 = arith.constant 5.000000e-01 : f32
    %116 = vector.broadcast %cst_62 : f32 to vector<4x256xf32>
    %117 = arith.mulf %116, %115 : vector<4x256xf32>
    %cst_63 = arith.constant 4.471500e-02 : f32
    %118 = vector.broadcast %cst_63 : f32 to vector<4x256xf32>
    %119 = arith.mulf %118, %115 : vector<4x256xf32>
    %120 = arith.mulf %119, %115 : vector<4x256xf32>
    %121 = arith.mulf %120, %115 : vector<4x256xf32>
    %122 = arith.addf %115, %121 : vector<4x256xf32>
    %cst_64 = arith.constant 0.797884583 : f32
    %123 = vector.broadcast %cst_64 : f32 to vector<4x256xf32>
    %124 = arith.mulf %123, %122 : vector<4x256xf32>
    %125 = math.tanh %124 : vector<4x256xf32>
    %cst_65 = arith.constant 1.000000e+00 : f32
    %126 = vector.broadcast %cst_65 : f32 to vector<4x256xf32>
    %127 = arith.addf %126, %125 : vector<4x256xf32>
    %128 = arith.mulf %117, %127 : vector<4x256xf32>
    %129 = arith.truncf %128 : vector<4x256xf32> to vector<4x256xbf16>
    %c0_66 = arith.constant 0 : index
    %c0_67 = arith.constant 0 : index
    %c0_68 = arith.constant 0 : index
    %130 = vector.load %arg17[%c0_66, %c0_67, %c0_68] : memref<1x256x64xbf16, #tpu.memory_space<vmem>>, vector<1x256x64xbf16>
    %131 = vector.shape_cast %130 : vector<1x256x64xbf16> to vector<256x64xbf16>
    %cst_69 = arith.constant dense<0.000000e+00> : vector<4x64xf32>
    %132 = tpu.matmul %129, %131, %cst_69 {dimension_numbers = #tpu.dot_dimension_numbers<[1], [0], [0], [1], [0, 0, 1, 1], [], []>} : vector<4x256xbf16>, vector<256x64xbf16>, vector<4x64xf32> -> vector<4x64xf32>
    %c0_70 = arith.constant 0 : index
    %c0_71 = arith.constant 0 : index
    %c0_72 = arith.constant 0 : index
    %133 = vector.load %arg18[%c0_70, %c0_71, %c0_72] : memref<1x1x64xf32, #tpu.memory_space<vmem>>, vector<1x1x64xf32>
    %134 = vector.shape_cast %133 : vector<1x1x64xf32> to vector<1x64xf32>
    %135 = vector.broadcast %134 : vector<1x64xf32> to vector<4x64xf32>
    %136 = arith.addf %132, %135 : vector<4x64xf32>
    %137 = arith.addf %82, %136 : vector<4x64xf32>
    %c0_73 = arith.constant 0 : index
    %c0_74 = arith.constant 0 : index
    %138 = vector.load %arg19[%c0_73, %c0_74] : memref<4x64xf32, #tpu.memory_space<vmem>>, vector<4x64xf32>
    tpu.vector_store %arg19[%c0_73, %c0_74], %137 {strides = array<i32>} : memref<4x64xf32, #tpu.memory_space<vmem>>, vector<4x64xf32>,
    return
  }
  func.func @transform_0(%arg0: i32) -> (i32, i32) {
    %c0_i32 = arith.constant 0 : i32
    %c0_i32_0 = arith.constant 0 : i32
    %c0_i32_1 = arith.constant 0 : i32
    return %c0_i32, %c0_i32_0 : i32, i32
  }
  func.func @transform_1(%arg0: i32) -> (i32, i32) {
    %c0_i32 = arith.constant 0 : i32
    %c0_i32_0 = arith.constant 0 : i32
    %c0_i32_1 = arith.constant 0 : i32
    return %c0_i32, %c0_i32_0 : i32, i32
  }
  func.func @transform_2(%arg0: i32) -> (i32, i32, i32) {
    %c0_i32 = arith.constant 0 : i32
    %c0_i32_0 = arith.constant 0 : i32
    %c0_i32_1 = arith.constant 0 : i32
    return %arg0, %c0_i32, %c0_i32_0 : i32, i32, i32
  }
  func.func @transform_3(%arg0: i32) -> (i32, i32, i32) {
    %c0_i32 = arith.constant 0 : i32
    %c0_i32_0 = arith.constant 0 : i32
    %c0_i32_1 = arith.constant 0 : i32
    return %arg0, %c0_i32, %c0_i32_0 : i32, i32, i32
  }
  func.func @transform_4(%arg0: i32) -> (i32, i32, i32) {
    %c0_i32 = arith.constant 0 : i32
    %c0_i32_0 = arith.constant 0 : i32
    %c0_i32_1 = arith.constant 0 : i32
    return %arg0, %c0_i32, %c0_i32_0 : i32, i32, i32
  }
  func.func @transform_5(%arg0: i32) -> (i32, i32, i32) {
    %c0_i32 = arith.constant 0 : i32
    %c0_i32_0 = arith.constant 0 : i32
    %c0_i32_1 = arith.constant 0 : i32
    return %arg0, %c0_i32, %c0_i32_0 : i32, i32, i32
  }
  func.func @transform_6(%arg0: i32) -> (i32, i32, i32) {
    %c0_i32 = arith.constant 0 : i32
    %c0_i32_0 = arith.constant 0 : i32
    %c0_i32_1 = arith.constant 0 : i32
    return %arg0, %c0_i32, %c0_i32_0 : i32, i32, i32
  }
  func.func @transform_7(%arg0: i32) -> (i32, i32, i32) {
    %c0_i32 = arith.constant 0 : i32
    %c0_i32_0 = arith.constant 0 : i32
    %c0_i32_1 = arith.constant 0 : i32
    return %arg0, %c0_i32, %c0_i32_0 : i32, i32, i32
  }
  func.func @transform_8(%arg0: i32) -> (i32, i32, i32) {
    %c0_i32 = arith.constant 0 : i32
    %c0_i32_0 = arith.constant 0 : i32
    %c0_i32_1 = arith.constant 0 : i32
    return %arg0, %c0_i32, %c0_i32_0 : i32, i32, i32
  }
  func.func @transform_9(%arg0: i32) -> (i32, i32, i32) {
    %c0_i32 = arith.constant 0 : i32
    %c0_i32_0 = arith.constant 0 : i32
    %c0_i32_1 = arith.constant 0 : i32
    return %arg0, %c0_i32, %c0_i32_0 : i32, i32, i32
  }
  func.func @transform_10(%arg0: i32) -> (i32, i32, i32) {
    %c0_i32 = arith.constant 0 : i32
    %c0_i32_0 = arith.constant 0 : i32
    %c0_i32_1 = arith.constant 0 : i32
    return %arg0, %c0_i32, %c0_i32_0 : i32, i32, i32
  }
  func.func @transform_11(%arg0: i32) -> (i32, i32, i32) {
    %c0_i32 = arith.constant 0 : i32
    %c0_i32_0 = arith.constant 0 : i32
    %c0_i32_1 = arith.constant 0 : i32
    return %arg0, %c0_i32, %c0_i32_0 : i32, i32, i32
  }
  func.func @transform_12(%arg0: i32) -> (i32, i32, i32) {
    %c0_i32 = arith.constant 0 : i32
    %c0_i32_0 = arith.constant 0 : i32
    %c0_i32_1 = arith.constant 0 : i32
    return %arg0, %c0_i32, %c0_i32_0 : i32, i32, i32
  }
  func.func @transform_13(%arg0: i32) -> (i32, i32, i32) {
    %c0_i32 = arith.constant 0 : i32
    %c0_i32_0 = arith.constant 0 : i32
    %c0_i32_1 = arith.constant 0 : i32
    return %arg0, %c0_i32, %c0_i32_0 : i32, i32, i32
  }
  func.func @transform_14(%arg0: i32) -> (i32, i32, i32) {
    %c0_i32 = arith.constant 0 : i32
    %c0_i32_0 = arith.constant 0 : i32
    %c0_i32_1 = arith.constant 0 : i32
    return %arg0, %c0_i32, %c0_i32_0 : i32, i32, i32
  }
  func.func @transform_15(%arg0: i32) -> (i32, i32, i32) {
    %c0_i32 = arith.constant 0 : i32
    %c0_i32_0 = arith.constant 0 : i32
    %c0_i32_1 = arith.constant 0 : i32
    return %arg0, %c0_i32, %c0_i32_0 : i32, i32, i32
  }
  func.func @transform_16(%arg0: i32) -> (i32, i32, i32) {
    %c0_i32 = arith.constant 0 : i32
    %c0_i32_0 = arith.constant 0 : i32
    %c0_i32_1 = arith.constant 0 : i32
    return %arg0, %c0_i32, %c0_i32_0 : i32, i32, i32
  }
  func.func @transform_17(%arg0: i32) -> (i32, i32, i32) {
    %c0_i32 = arith.constant 0 : i32
    %c0_i32_0 = arith.constant 0 : i32
    %c0_i32_1 = arith.constant 0 : i32
    return %arg0, %c0_i32, %c0_i32_0 : i32, i32, i32
  }
  func.func @transform_18(%arg0: i32) -> (i32, i32) {
    %c0_i32 = arith.constant 0 : i32
    %c0_i32_0 = arith.constant 0 : i32
    %c0_i32_1 = arith.constant 0 : i32
    return %c0_i32, %c0_i32_0 : i32, i32
  }
}

</mosaic_0001>

<llo_original>
// kernel: tpu_custom_call.1
$region0: #{tpu_custom_call.1}
  #allocation0 [shape = 'u32[]', space=smem, size = 0x4, offset = 0x4, fixed_abs, tag = 'smem constant byte address 0x4 - core index']
  #allocation1 [shape = 'u32[144,128]{1,0:T(1,128)}', space=vmem, size = 0x12000, scoped, tag = 'internal scratch']
  %s0 = inlined_call_operand.hbm [shape: f32[4,64], index: 0, kind: input, shape index: {}]
  %s1 = inlined_call_operand.hbm [shape: f32[64,64], index: 1, kind: input, shape index: {}]
  %s2 = inlined_call_operand.hbm [shape: f32[3,1,64], index: 2, kind: input, shape index: {}]
  %s3 = inlined_call_operand.hbm [shape: f32[3,1,64], index: 3, kind: input, shape index: {}]
  %s4 = inlined_call_operand.vmem [shape: bf16[3,64,64], index: 4, kind: input, shape index: {}]
  %s5 = inlined_call_operand.vmem [shape: f32[3,1,64], index: 5, kind: input, shape index: {}]
  %s6 = inlined_call_operand.vmem [shape: bf16[3,64,64], index: 6, kind: input, shape index: {}]
  %s7 = inlined_call_operand.vmem [shape: f32[3,1,64], index: 7, kind: input, shape index: {}]
  %s8 = inlined_call_operand.vmem [shape: bf16[3,64,64], index: 8, kind: input, shape index: {}]
  %s9 = inlined_call_operand.vmem [shape: f32[3,1,64], index: 9, kind: input, shape index: {}]
  %s10 = inlined_call_operand.vmem [shape: bf16[3,64,64], index: 10, kind: input, shape index: {}]
  %s11 = inlined_call_operand.vmem [shape: f32[3,1,64], index: 11, kind: input, shape index: {}]
  %s12 = inlined_call_operand.vmem [shape: f32[3,1,64], index: 12, kind: input, shape index: {}]
  %s13 = inlined_call_operand.vmem [shape: f32[3,1,64], index: 13, kind: input, shape index: {}]
  %s14 = inlined_call_operand.vmem [shape: bf16[3,64,256], index: 14, kind: input, shape index: {}]
  %s15 = inlined_call_operand.vmem [shape: f32[3,1,256], index: 15, kind: input, shape index: {}]
  %s16 = inlined_call_operand.vmem [shape: bf16[3,256,64], index: 16, kind: input, shape index: {}]
  %s17 = inlined_call_operand.vmem [shape: f32[3,1,64], index: 17, kind: input, shape index: {}]
  %s18 = inlined_call_operand.hbm [shape: f32[4,64], index: 18, kind: output, shape index: {}]
  %s19 = sld [smem:[#allocation0]]
  $region125: #{tpu_custom_call.1} parent=0
    _
  %s21 = ssub.s32 1, %s19
  %s22 = scalar_select 0, %s21, %s19
  $region1: #{tpu_custom_call.1} parent=0
    #allocation2 [shape = 'u8[2048]{0}', space=vmem, size = 0x800, scoped, tag = 'input window, operand 0, single buffered']
    #allocation3 [shape = 's32[2]{0}', space=sflag, size = 0x8, scoped, tag = 'scoped memory for tpu_custom_call.1']
    #allocation4 [shape = 's32[2]{0}', space=sflag, size = 0x8, scoped, tag = 'scoped memory for tpu_custom_call.1']
    #allocation5 [shape = 'u8[32768]{0}', space=vmem, size = 0x8000, scoped, tag = 'input window, operand 1, single buffered']
    #allocation6 [shape = 's32[1]{0}', space=sflag, size = 0x4, scoped, tag = 'scoped memory for tpu_custom_call.1']
    #allocation7 [shape = 'u8[1024]{0}', space=vmem, size = 0x400, scoped, tag = 'input window, operand 2']
    #allocation8 [shape = 'u8[1024]{0}', space=vmem, size = 0x400, scoped, tag = 'input window, operand 3']
    #allocation9 [shape = 'u8[2048]{0}', space=vmem, size = 0x800, scoped, tag = 'output window, operand 0, single buffered']
    %23 = vsyncpa [#allocation3], 0
    %24 = vsyncpa [#allocation6], 0
    %25 = vsyncpa [#allocation4], 0
    loop: start=0, step=1, limit=5
    $region2: #{tpu_custom_call.1} parent=1 // loop_pre_header
      _
    $region3: #{tpu_custom_call.1} parent=1 // loop_header
      %s27 = sphi 0, %s31
      %p28 = scmp.ge.s32.totalorder %s27, 5
      %s35 = sphi 0, %s35
      %s37 = sphi 0, %s35
      %s38 = sphi 0, %s37
      %s52 = sphi 0, %s38
      %s56 = sphi 0, %s56
      %s58 = sphi 0, %s56
      %s59 = sphi 0, %s58
      %s73 = sphi 0, %s59
      %s79 = sphi 0, %s81
      %s82 = sphi 0, %s79
      %s83 = sphi 0, %s82
      %s99 = sphi 0, %s83
      %s105 = sphi 0, %s107
      %s108 = sphi 0, %s105
      %s109 = sphi 0, %s108
      %s125 = sphi 0, %s109
      %s131 = sphi 0, %s133
      %s134 = sphi 0, %s131
      %s135 = sphi 0, %s134
      %s151 = sphi 0, %s135
      %s157 = sphi 0, %s159
      %s160 = sphi 0, %s157
      %s161 = sphi 0, %s160
      %s177 = sphi 0, %s161
      %s183 = sphi 0, %s185
      %s186 = sphi 0, %s183
      %s187 = sphi 0, %s186
      %s203 = sphi 0, %s187
      %s209 = sphi 0, %s211
      %s212 = sphi 0, %s209
      %s213 = sphi 0, %s212
      %s229 = sphi 0, %s213
      %s235 = sphi 0, %s237
      %s238 = sphi 0, %s235
      %s239 = sphi 0, %s238
      %s255 = sphi 0, %s239
      %s261 = sphi 0, %s263
      %s264 = sphi 0, %s261
      %s265 = sphi 0, %s264
      %s281 = sphi 0, %s265
      %s287 = sphi 0, %s289
      %s290 = sphi 0, %s287
      %s291 = sphi 0, %s290
      %s307 = sphi 0, %s291
      %s313 = sphi 0, %s315
      %s316 = sphi 0, %s313
      %s317 = sphi 0, %s316
      %s333 = sphi 0, %s317
      %s339 = sphi 0, %s341
      %s342 = sphi 0, %s339
      %s343 = sphi 0, %s342
      %s359 = sphi 0, %s343
      %s365 = sphi 0, %s367
      %s368 = sphi 0, %s365
      %s369 = sphi 0, %s368
      %s385 = sphi 0, %s369
      %s391 = sphi 0, %s393
      %s394 = sphi 0, %s391
      %s395 = sphi 0, %s394
      %s411 = sphi 0, %s395
      %s417 = sphi 0, %s419
      %s420 = sphi 0, %s417
      %s421 = sphi 0, %s420
      %s437 = sphi 0, %s421
      %s443 = sphi 0, %s445
      %s446 = sphi 0, %s443
      %s447 = sphi 0, %s446
      %s463 = sphi 0, %s447
      %s469 = sphi 0, %s471
      %s472 = sphi 0, %s469
      %s473 = sphi 0, %s472
      %s489 = sphi 0, %s473
      %s493 = sphi 0, %s493
      %s495 = sphi 0, %s493
      %s496 = sphi 0, %s495
      %s510 = sphi 0, %s496
    $region4: #{tpu_custom_call.1} parent=1 // loop_header_branch
      %30 = sbr.rel (%p28) target = $region8
    $region5: #{tpu_custom_call.1} parent=1 // loop_body
      %s32 = ssub.s32 %s27, 1
      %s33 = ssub.s32 %s27, 2
      %s34 = sadd.s32 %s27, 1
      %s36 = sadd.s32 %s35, 1
      %p39 = scmp.eq.s32.totalorder %s27, 2
      %p40 = scmp.ne.s32.totalorder %s35, %s37
      %p41 = scmp.eq.s32.totalorder %s27, 0
      %p42 = por %p40, %p41
      %p43 = scmp.ne.s32.totalorder %s35, %s37
      %p44 = scmp.eq.s32.totalorder %s32, 2
      %p45 = por %p43, %p44
      %p46 = scmp.ne.s32.totalorder %s37, %s38
      %p47 = scmp.eq.s32.totalorder %s32, 0
      %p48 = por %p46, %p47
      %p49 = scmp.ne.s32.totalorder %s37, %s38
      %p50 = scmp.eq.s32.totalorder %s33, 2
      %p51 = por %p49, %p50
      %p53 = scmp.ne.s32.totalorder %s38, %s52
      %p54 = scmp.eq.s32.totalorder %s33, 0
      %p55 = por %p53, %p54
      %s57 = sadd.s32 %s56, 1
      %p60 = scmp.eq.s32.totalorder %s27, 2
      %p61 = scmp.ne.s32.totalorder %s56, %s58
      %p62 = scmp.eq.s32.totalorder %s27, 0
      %p63 = por %p61, %p62
      %p64 = scmp.ne.s32.totalorder %s56, %s58
      %p65 = scmp.eq.s32.totalorder %s32, 2
      %p66 = por %p64, %p65
      %p67 = scmp.ne.s32.totalorder %s58, %s59
      %p68 = scmp.eq.s32.totalorder %s32, 0
      %p69 = por %p67, %p68
      %p70 = scmp.ne.s32.totalorder %s58, %s59
      %p71 = scmp.eq.s32.totalorder %s33, 2
      %p72 = por %p70, %p71
      %p74 = scmp.ne.s32.totalorder %s59, %s73
      %p75 = scmp.eq.s32.totalorder %s33, 0
      %p76 = por %p74, %p75
      %s77 = ssub.s32 %s27, %s34
      %p78 = scmp.eq.s32.totalorder %s77, 0
      %s80 = sadd.s32 %s79, 1
      %s81 = scalar_select %p78, %s79, %s80
      %p84 = pneg %p78
      %p85 = scmp.eq.s32.totalorder %s27, 2
      %p86 = por %p84, %p85
      %p87 = scmp.ne.s32.totalorder %s79, %s82
      %p88 = scmp.eq.s32.totalorder %s27, 0
      %p89 = por %p87, %p88
      %p90 = scmp.ne.s32.totalorder %s79, %s82
      %p91 = scmp.eq.s32.totalorder %s32, 2
      %p92 = por %p90, %p91
      %p93 = scmp.ne.s32.totalorder %s82, %s83
      %p94 = scmp.eq.s32.totalorder %s32, 0
      %p95 = por %p93, %p94
      %p96 = scmp.ne.s32.totalorder %s82, %s83
      %p97 = scmp.eq.s32.totalorder %s33, 2
      %p98 = por %p96, %p97
      %p100 = scmp.ne.s32.totalorder %s83, %s99
      %p101 = scmp.eq.s32.totalorder %s33, 0
      %p102 = por %p100, %p101
      %s103 = ssub.s32 %s27, %s34
      %p104 = scmp.eq.s32.totalorder %s103, 0
      %s106 = sadd.s32 %s105, 1
      %s107 = scalar_select %p104, %s105, %s106
      %p110 = pneg %p104
      %p111 = scmp.eq.s32.totalorder %s27, 2
      %p112 = por %p110, %p111
      %p113 = scmp.ne.s32.totalorder %s105, %s108
      %p114 = scmp.eq.s32.totalorder %s27, 0
      %p115 = por %p113, %p114
      %p116 = scmp.ne.s32.totalorder %s105, %s108
      %p117 = scmp.eq.s32.totalorder %s32, 2
      %p118 = por %p116, %p117
      %p119 = scmp.ne.s32.totalorder %s108, %s109
      %p120 = scmp.eq.s32.totalorder %s32, 0
      %p121 = por %p119, %p120
      %p122 = scmp.ne.s32.totalorder %s108, %s109
      %p123 = scmp.eq.s32.totalorder %s33, 2
      %p124 = por %p122, %p123
      %p126 = scmp.ne.s32.totalorder %s109, %s125
      %p127 = scmp.eq.s32.totalorder %s33, 0
      %p128 = por %p126, %p127
      %s129 = ssub.s32 %s27, %s34
      %p130 = scmp.eq.s32.totalorder %s129, 0
      %s132 = sadd.s32 %s131, 1
      %s133 = scalar_select %p130, %s131, %s132
      %p136 = pneg %p130
      %p137 = scmp.eq.s32.totalorder %s27, 2
      %p138 = por %p136, %p137
      %p139 = scmp.ne.s32.totalorder %s131, %s134
      %p140 = scmp.eq.s32.totalorder %s27, 0
      %p141 = por %p139, %p140
      %p142 = scmp.ne.s32.totalorder %s131, %s134
      %p143 = scmp.eq.s32.totalorder %s32, 2
      %p144 = por %p142, %p143
      %p145 = scmp.ne.s32.totalorder %s134, %s135
      %p146 = scmp.eq.s32.totalorder %s32, 0
      %p147 = por %p145, %p146
      %p148 = scmp.ne.s32.totalorder %s134, %s135
      %p149 = scmp.eq.s32.totalorder %s33, 2
      %p150 = por %p148, %p149
      %p152 = scmp.ne.s32.totalorder %s135, %s151
      %p153 = scmp.eq.s32.totalorder %s33, 0
      %p154 = por %p152, %p153
      %s155 = ssub.s32 %s27, %s34
      %p156 = scmp.eq.s32.totalorder %s155, 0
      %s158 = sadd.s32 %s157, 1
      %s159 = scalar_select %p156, %s157, %s158
      %p162 = pneg %p156
      %p163 = scmp.eq.s32.totalorder %s27, 2
      %p164 = por %p162, %p163
      %p165 = scmp.ne.s32.totalorder %s157, %s160
      %p166 = scmp.eq.s32.totalorder %s27, 0
      %p167 = por %p165, %p166
      %p168 = scmp.ne.s32.totalorder %s157, %s160
      %p169 = scmp.eq.s32.totalorder %s32, 2
      %p170 = por %p168, %p169
      %p171 = scmp.ne.s32.totalorder %s160, %s161
      %p172 = scmp.eq.s32.totalorder %s32, 0
      %p173 = por %p171, %p172
      %p174 = scmp.ne.s32.totalorder %s160, %s161
      %p175 = scmp.eq.s32.totalorder %s33, 2
      %p176 = por %p174, %p175
      %p178 = scmp.ne.s32.totalorder %s161, %s177
      %p179 = scmp.eq.s32.totalorder %s33, 0
      %p180 = por %p178, %p179
      %s181 = ssub.s32 %s27, %s34
      %p182 = scmp.eq.s32.totalorder %s181, 0
      %s184 = sadd.s32 %s183, 1
      %s185 = scalar_select %p182, %s183, %s184
      %p188 = pneg %p182
      %p189 = scmp.eq.s32.totalorder %s27, 2
      %p190 = por %p188, %p189
      %p191 = scmp.ne.s32.totalorder %s183, %s186
      %p192 = scmp.eq.s32.totalorder %s27, 0
      %p193 = por %p191, %p192
      %p194 = scmp.ne.s32.totalorder %s183, %s186
      %p195 = scmp.eq.s32.totalorder %s32, 2
      %p196 = por %p194, %p195
      %p197 = scmp.ne.s32.totalorder %s186, %s187
      %p198 = scmp.eq.s32.totalorder %s32, 0
      %p199 = por %p197, %p198
      %p200 = scmp.ne.s32.totalorder %s186, %s187
      %p201 = scmp.eq.s32.totalorder %s33, 2
      %p202 = por %p200, %p201
      %p204 = scmp.ne.s32.totalorder %s187, %s203
      %p205 = scmp.eq.s32.totalorder %s33, 0
      %p206 = por %p204, %p205
      %s207 = ssub.s32 %s27, %s34
      %p208 = scmp.eq.s32.totalorder %s207, 0
      %s210 = sadd.s32 %s209, 1
      %s211 = scalar_select %p208, %s209, %s210
      %p214 = pneg %p208
      %p215 = scmp.eq.s32.totalorder %s27, 2
      %p216 = por %p214, %p215
      %p217 = scmp.ne.s32.totalorder %s209, %s212
      %p218 = scmp.eq.s32.totalorder %s27, 0
      %p219 = por %p217, %p218
      %p220 = scmp.ne.s32.totalorder %s209, %s212
      %p221 = scmp.eq.s32.totalorder %s32, 2
      %p222 = por %p220, %p221
      %p223 = scmp.ne.s32.totalorder %s212, %s213
      %p224 = scmp.eq.s32.totalorder %s32, 0
      %p225 = por %p223, %p224
      %p226 = scmp.ne.s32.totalorder %s212, %s213
      %p227 = scmp.eq.s32.totalorder %s33, 2
      %p228 = por %p226, %p227
      %p230 = scmp.ne.s32.totalorder %s213, %s229
      %p231 = scmp.eq.s32.totalorder %s33, 0
      %p232 = por %p230, %p231
      %s233 = ssub.s32 %s27, %s34
      %p234 = scmp.eq.s32.totalorder %s233, 0
      %s236 = sadd.s32 %s235, 1
      %s237 = scalar_select %p234, %s235, %s236
      %p240 = pneg %p234
      %p241 = scmp.eq.s32.totalorder %s27, 2
      %p242 = por %p240, %p241
      %p243 = scmp.ne.s32.totalorder %s235, %s238
      %p244 = scmp.eq.s32.totalorder %s27, 0
      %p245 = por %p243, %p244
      %p246 = scmp.ne.s32.totalorder %s235, %s238
      %p247 = scmp.eq.s32.totalorder %s32, 2
      %p248 = por %p246, %p247
      %p249 = scmp.ne.s32.totalorder %s238, %s239
      %p250 = scmp.eq.s32.totalorder %s32, 0
      %p251 = por %p249, %p250
      %p252 = scmp.ne.s32.totalorder %s238, %s239
      %p253 = scmp.eq.s32.totalorder %s33, 2
      %p254 = por %p252, %p253
      %p256 = scmp.ne.s32.totalorder %s239, %s255
      %p257 = scmp.eq.s32.totalorder %s33, 0
      %p258 = por %p256, %p257
      %s259 = ssub.s32 %s27, %s34
      %p260 = scmp.eq.s32.totalorder %s259, 0
      %s262 = sadd.s32 %s261, 1
      %s263 = scalar_select %p260, %s261, %s262
      %p266 = pneg %p260
      %p267 = scmp.eq.s32.totalorder %s27, 2
      %p268 = por %p266, %p267
      %p269 = scmp.ne.s32.totalorder %s261, %s264
      %p270 = scmp.eq.s32.totalorder %s27, 0
      %p271 = por %p269, %p270
      %p272 = scmp.ne.s32.totalorder %s261, %s264
      %p273 = scmp.eq.s32.totalorder %s32, 2
      %p274 = por %p272, %p273
      %p275 = scmp.ne.s32.totalorder %s264, %s265
      %p276 = scmp.eq.s32.totalorder %s32, 0
      %p277 = por %p275, %p276
      %p278 = scmp.ne.s32.totalorder %s264, %s265
      %p279 = scmp.eq.s32.totalorder %s33, 2
      %p280 = por %p278, %p279
      %p282 = scmp.ne.s32.totalorder %s265, %s281
      %p283 = scmp.eq.s32.totalorder %s33, 0
      %p284 = por %p282, %p283
      %s285 = ssub.s32 %s27, %s34
      %p286 = scmp.eq.s32.totalorder %s285, 0
      %s288 = sadd.s32 %s287, 1
      %s289 = scalar_select %p286, %s287, %s288
      %p292 = pneg %p286
      %p293 = scmp.eq.s32.totalorder %s27, 2
      %p294 = por %p292, %p293
      %p295 = scmp.ne.s32.totalorder %s287, %s290
      %p296 = scmp.eq.s32.totalorder %s27, 0
      %p297 = por %p295, %p296
      %p298 = scmp.ne.s32.totalorder %s287, %s290
      %p299 = scmp.eq.s32.totalorder %s32, 2
      %p300 = por %p298, %p299
      %p301 = scmp.ne.s32.totalorder %s290, %s291
      %p302 = scmp.eq.s32.totalorder %s32, 0
      %p303 = por %p301, %p302
      %p304 = scmp.ne.s32.totalorder %s290, %s291
      %p305 = scmp.eq.s32.totalorder %s33, 2
      %p306 = por %p304, %p305
      %p308 = scmp.ne.s32.totalorder %s291, %s307
      %p309 = scmp.eq.s32.totalorder %s33, 0
      %p310 = por %p308, %p309
      %s311 = ssub.s32 %s27, %s34
      %p312 = scmp.eq.s32.totalorder %s311, 0
      %s314 = sadd.s32 %s313, 1
      %s315 = scalar_select %p312, %s313, %s314
      %p318 = pneg %p312
      %p319 = scmp.eq.s32.totalorder %s27, 2
      %p320 = por %p318, %p319
      %p321 = scmp.ne.s32.totalorder %s313, %s316
      %p322 = scmp.eq.s32.totalorder %s27, 0
      %p323 = por %p321, %p322
      %p324 = scmp.ne.s32.totalorder %s313, %s316
      %p325 = scmp.eq.s32.totalorder %s32, 2
      %p326 = por %p324, %p325
      %p327 = scmp.ne.s32.totalorder %s316, %s317
      %p328 = scmp.eq.s32.totalorder %s32, 0
      %p329 = por %p327, %p328
      %p330 = scmp.ne.s32.totalorder %s316, %s317
      %p331 = scmp.eq.s32.totalorder %s33, 2
      %p332 = por %p330, %p331
      %p334 = scmp.ne.s32.totalorder %s317, %s333
      %p335 = scmp.eq.s32.totalorder %s33, 0
      %p336 = por %p334, %p335
      %s337 = ssub.s32 %s27, %s34
      %p338 = scmp.eq.s32.totalorder %s337, 0
      %s340 = sadd.s32 %s339, 1
      %s341 = scalar_select %p338, %s339, %s340
      %p344 = pneg %p338
      %p345 = scmp.eq.s32.totalorder %s27, 2
      %p346 = por %p344, %p345
      %p347 = scmp.ne.s32.totalorder %s339, %s342
      %p348 = scmp.eq.s32.totalorder %s27, 0
      %p349 = por %p347, %p348
      %p350 = scmp.ne.s32.totalorder %s339, %s342
      %p351 = scmp.eq.s32.totalorder %s32, 2
      %p352 = por %p350, %p351
      %p353 = scmp.ne.s32.totalorder %s342, %s343
      %p354 = scmp.eq.s32.totalorder %s32, 0
      %p355 = por %p353, %p354
      %p356 = scmp.ne.s32.totalorder %s342, %s343
      %p357 = scmp.eq.s32.totalorder %s33, 2
      %p358 = por %p356, %p357
      %p360 = scmp.ne.s32.totalorder %s343, %s359
      %p361 = scmp.eq.s32.totalorder %s33, 0
      %p362 = por %p360, %p361
      %s363 = ssub.s32 %s27, %s34
      %p364 = scmp.eq.s32.totalorder %s363, 0
      %s366 = sadd.s32 %s365, 1
      %s367 = scalar_select %p364, %s365, %s366
      %p370 = pneg %p364
      %p371 = scmp.eq.s32.totalorder %s27, 2
      %p372 = por %p370, %p371
      %p373 = scmp.ne.s32.totalorder %s365, %s368
      %p374 = scmp.eq.s32.totalorder %s27, 0
      %p375 = por %p373, %p374
      %p376 = scmp.ne.s32.totalorder %s365, %s368
      %p377 = scmp.eq.s32.totalorder %s32, 2
      %p378 = por %p376, %p377
      %p379 = scmp.ne.s32.totalorder %s368, %s369
      %p380 = scmp.eq.s32.totalorder %s32, 0
      %p381 = por %p379, %p380
      %p382 = scmp.ne.s32.totalorder %s368, %s369
      %p383 = scmp.eq.s32.totalorder %s33, 2
      %p384 = por %p382, %p383
      %p386 = scmp.ne.s32.totalorder %s369, %s385
      %p387 = scmp.eq.s32.totalorder %s33, 0
      %p388 = por %p386, %p387
      %s389 = ssub.s32 %s27, %s34
      %p390 = scmp.eq.s32.totalorder %s389, 0
      %s392 = sadd.s32 %s391, 1
      %s393 = scalar_select %p390, %s391, %s392
      %p396 = pneg %p390
      %p397 = scmp.eq.s32.totalorder %s27, 2
      %p398 = por %p396, %p397
      %p399 = scmp.ne.s32.totalorder %s391, %s394
      %p400 = scmp.eq.s32.totalorder %s27, 0
      %p401 = por %p399, %p400
      %p402 = scmp.ne.s32.totalorder %s391, %s394
      %p403 = scmp.eq.s32.totalorder %s32, 2
      %p404 = por %p402, %p403
      %p405 = scmp.ne.s32.totalorder %s394, %s395
      %p406 = scmp.eq.s32.totalorder %s32, 0
      %p407 = por %p405, %p406
      %p408 = scmp.ne.s32.totalorder %s394, %s395
      %p409 = scmp.eq.s32.totalorder %s33, 2
      %p410 = por %p408, %p409
      %p412 = scmp.ne.s32.totalorder %s395, %s411
      %p413 = scmp.eq.s32.totalorder %s33, 0
      %p414 = por %p412, %p413
      %s415 = ssub.s32 %s27, %s34
      %p416 = scmp.eq.s32.totalorder %s415, 0
      %s418 = sadd.s32 %s417, 1
      %s419 = scalar_select %p416, %s417, %s418
      %p422 = pneg %p416
      %p423 = scmp.eq.s32.totalorder %s27, 2
      %p424 = por %p422, %p423
      %p425 = scmp.ne.s32.totalorder %s417, %s420
      %p426 = scmp.eq.s32.totalorder %s27, 0
      %p427 = por %p425, %p426
      %p428 = scmp.ne.s32.totalorder %s417, %s420
      %p429 = scmp.eq.s32.totalorder %s32, 2
      %p430 = por %p428, %p429
      %p431 = scmp.ne.s32.totalorder %s420, %s421
      %p432 = scmp.eq.s32.totalorder %s32, 0
      %p433 = por %p431, %p432
      %p434 = scmp.ne.s32.totalorder %s420, %s421
      %p435 = scmp.eq.s32.totalorder %s33, 2
      %p436 = por %p434, %p435
      %p438 = scmp.ne.s32.totalorder %s421, %s437
      %p439 = scmp.eq.s32.totalorder %s33, 0
      %p440 = por %p438, %p439
      %s441 = ssub.s32 %s27, %s34
      %p442 = scmp.eq.s32.totalorder %s441, 0
      %s444 = sadd.s32 %s443, 1
      %s445 = scalar_select %p442, %s443, %s444
      %p448 = pneg %p442
      %p449 = scmp.eq.s32.totalorder %s27, 2
      %p450 = por %p448, %p449
      %p451 = scmp.ne.s32.totalorder %s443, %s446
      %p452 = scmp.eq.s32.totalorder %s27, 0
      %p453 = por %p451, %p452
      %p454 = scmp.ne.s32.totalorder %s443, %s446
      %p455 = scmp.eq.s32.totalorder %s32, 2
      %p456 = por %p454, %p455
      %p457 = scmp.ne.s32.totalorder %s446, %s447
      %p458 = scmp.eq.s32.totalorder %s32, 0
      %p459 = por %p457, %p458
      %p460 = scmp.ne.s32.totalorder %s446, %s447
      %p461 = scmp.eq.s32.totalorder %s33, 2
      %p462 = por %p460, %p461
      %p464 = scmp.ne.s32.totalorder %s447, %s463
      %p465 = scmp.eq.s32.totalorder %s33, 0
      %p466 = por %p464, %p465
      %s467 = ssub.s32 %s27, %s34
      %p468 = scmp.eq.s32.totalorder %s467, 0
      %s470 = sadd.s32 %s469, 1
      %s471 = scalar_select %p468, %s469, %s470
      %p474 = pneg %p468
      %p475 = scmp.eq.s32.totalorder %s27, 2
      %p476 = por %p474, %p475
      %p477 = scmp.ne.s32.totalorder %s469, %s472
      %p478 = scmp.eq.s32.totalorder %s27, 0
      %p479 = por %p477, %p478
      %p480 = scmp.ne.s32.totalorder %s469, %s472
      %p481 = scmp.eq.s32.totalorder %s32, 2
      %p482 = por %p480, %p481
      %p483 = scmp.ne.s32.totalorder %s472, %s473
      %p484 = scmp.eq.s32.totalorder %s32, 0
      %p485 = por %p483, %p484
      %p486 = scmp.ne.s32.totalorder %s472, %s473
      %p487 = scmp.eq.s32.totalorder %s33, 2
      %p488 = por %p486, %p487
      %p490 = scmp.ne.s32.totalorder %s473, %s489
      %p491 = scmp.eq.s32.totalorder %s33, 0
      %p492 = por %p490, %p491
      %s494 = sadd.s32 %s493, 1
      %p497 = scmp.eq.s32.totalorder %s27, 2
      %p498 = scmp.ne.s32.totalorder %s493, %s495
      %p499 = scmp.eq.s32.totalorder %s27, 0
      %p500 = por %p498, %p499
      %p501 = scmp.ne.s32.totalorder %s493, %s495
      %p502 = scmp.eq.s32.totalorder %s32, 2
      %p503 = por %p501, %p502
      %p504 = scmp.ne.s32.totalorder %s495, %s496
      %p505 = scmp.eq.s32.totalorder %s32, 0
      %p506 = por %p504, %p505
      %p507 = scmp.ne.s32.totalorder %s495, %s496
      %p508 = scmp.eq.s32.totalorder %s33, 2
      %p509 = por %p507, %p508
      %p511 = scmp.ne.s32.totalorder %s496, %s510
      %p512 = scmp.eq.s32.totalorder %s33, 0
      %p513 = por %p511, %p512
      %p514 = scmp.le.s32.totalorder 1, %s27
      %p515 = scmp.lt.s32.totalorder %s27, 4
      %p516 = pnand %p514, %p515
      %p517 = pneg %p516
      // Predicated region
      $region9: #{tpu_custom_call.1} parent=5 // pred_check
        _
      $region10: #{tpu_custom_call.1} parent=5 // pred_check_branch
        %519 = sbr.rel (%p516) target = $region12
      $region11: #{tpu_custom_call.1} parent=5 // pred_region
        %s520 = ssub.s32 %s27, 1
        // Predicated region
        $region13: #{tpu_custom_call.1} parent=11 // pred_check
          %p521 = pneg %p48
        $region14: #{tpu_custom_call.1} parent=11 // pred_check_branch
          %523 = sbr.rel (%p521) target = $region16
        $region15: #{tpu_custom_call.1} parent=11 // pred_region
          %s525 = ssub.s32 64, 64
          %526 = vsyncadd [#allocation3], %s525
          %s528 = sshll.u32 [#allocation2], 4
          %s529 = int_to_ptr.vmem [resolvable:$true] %s528
          %531 = dma.hbm_to_vmem [thread:$0]  %s0, 64, %s529, [#allocation3]
        $region16: #{tpu_custom_call.1} parent=11 // pred_fallthru
          _
        // Predicated region
        $region17: #{tpu_custom_call.1} parent=11 // pred_check
          %p532 = pneg %p69
        $region18: #{tpu_custom_call.1} parent=11 // pred_check_branch
          %534 = sbr.rel (%p532) target = $region20
        $region19: #{tpu_custom_call.1} parent=11 // pred_region
          %s536 = ssub.s32 1024, 1024
          %537 = vsyncadd [#allocation6], %s536
          %s538 = sshll.u32 [#allocation5], 4
          %s539 = int_to_ptr.vmem [resolvable:$true] %s538
          %544 = dma.hbm_to_vmem [thread:$0]  %s1, 1024, %s539, [#allocation6], 128, 128, 8
        $region20: #{tpu_custom_call.1} parent=11 // pred_fallthru
          _
      $region12: #{tpu_custom_call.1} parent=5 // pred_fallthru
        _
      %p545 = scmp.lt.s32.totalorder %s27, 3
      // Predicated region
      $region21: #{tpu_custom_call.1} parent=5 // pred_check
        %p546 = pneg %p545
      $region22: #{tpu_custom_call.1} parent=5 // pred_check_branch
        %548 = sbr.rel (%p546) target = $region24
      $region23: #{tpu_custom_call.1} parent=5 // pred_region
        // Predicated region
        $region25: #{tpu_custom_call.1} parent=23 // pred_check
          %p549 = pneg %p89
        $region26: #{tpu_custom_call.1} parent=23 // pred_check_branch
          %551 = sbr.rel (%p549) target = $region28
        $region27: #{tpu_custom_call.1} parent=23 // pred_region
          %s552 = sand.u32 %s27, 1
          %s553 = scalar_lea.sflag [#allocation3], %s552
          %s554 = sand.u32 %s79, 1
          %s555 = scalar_lea.vmem [#allocation7], %s554
          %s557 = ssub.s32 16, 16
          %558 = vsyncadd %s553, %s557
          %s559 = smul.addr %s27, 16
          %s560 = scalar_lea.hbm %s2, %s559
          %s562 = sshll.u32 %s555, 4
          %s563 = int_to_ptr.vmem [resolvable:$true] %s562
          %565 = dma.hbm_to_vmem [thread:$0]  %s560, 16, %s563, %s553
        $region28: #{tpu_custom_call.1} parent=23 // pred_fallthru
          _
        // Predicated region
        $region29: #{tpu_custom_call.1} parent=23 // pred_check
          %p566 = pneg %p115
        $region30: #{tpu_custom_call.1} parent=23 // pred_check_branch
          %568 = sbr.rel (%p566) target = $region32
        $region31: #{tpu_custom_call.1} parent=23 // pred_region
          %s569 = sand.u32 %s27, 1
          %s570 = scalar_lea.sflag [#allocation3], %s569
          %s571 = sand.u32 %s105, 1
          %s572 = scalar_lea.vmem [#allocation8], %s571
          %s574 = ssub.s32 16, 16
          %575 = vsyncadd %s570, %s574
          %s576 = smul.addr %s27, 16
          %s577 = scalar_lea.hbm %s3, %s576
          %s579 = sshll.u32 %s572, 4
          %s580 = int_to_ptr.vmem [resolvable:$true] %s579
          %582 = dma.hbm_to_vmem [thread:$0]  %s577, 16, %s580, %s570
        $region32: #{tpu_custom_call.1} parent=23 // pred_fallthru
          _
        // Predicated region
        $region33: #{tpu_custom_call.1} parent=23 // pred_check
          %p583 = pneg %p141
        $region34: #{tpu_custom_call.1} parent=23 // pred_check_branch
          %585 = sbr.rel (%p583) target = $region36
        $region35: #{tpu_custom_call.1} parent=23 // pred_region
          %p586 = scmp.lt.s32.totalorder %s27, 2
          %s587 = scalar_select %p586, %s27, 2
          %s588 = smul.addr %s587, 8
          %s589 = smul.addr %s588, 4
          %s590 = scalar_lea.vmem %s4, %s589
        $region36: #{tpu_custom_call.1} parent=23 // pred_fallthru
          _
        // Predicated region
        $region37: #{tpu_custom_call.1} parent=23 // pred_check
          %p591 = pneg %p167
        $region38: #{tpu_custom_call.1} parent=23 // pred_check_branch
          %593 = sbr.rel (%p591) target = $region40
        $region39: #{tpu_custom_call.1} parent=23 // pred_region
          %p594 = scmp.lt.s32.totalorder %s27, 2
          %s595 = scalar_select %p594, %s27, 2
          %s596 = scalar_lea.vmem %s5, %s595
        $region40: #{tpu_custom_call.1} parent=23 // pred_fallthru
          _
        // Predicated region
        $region41: #{tpu_custom_call.1} parent=23 // pred_check
          %p597 = pneg %p193
        $region42: #{tpu_custom_call.1} parent=23 // pred_check_branch
          %599 = sbr.rel (%p597) target = $region44
        $region43: #{tpu_custom_call.1} parent=23 // pred_region
          %p600 = scmp.lt.s32.totalorder %s27, 2
          %s601 = scalar_select %p600, %s27, 2
          %s602 = smul.addr %s601, 8
          %s603 = smul.addr %s602, 4
          %s604 = scalar_lea.vmem %s6, %s603
        $region44: #{tpu_custom_call.1} parent=23 // pred_fallthru
          _
        // Predicated region
        $region45: #{tpu_custom_call.1} parent=23 // pred_check
          %p605 = pneg %p219
        $region46: #{tpu_custom_call.1} parent=23 // pred_check_branch
          %607 = sbr.rel (%p605) target = $region48
        $region47: #{tpu_custom_call.1} parent=23 // pred_region
          %p608 = scmp.lt.s32.totalorder %s27, 2
          %s609 = scalar_select %p608, %s27, 2
          %s610 = scalar_lea.vmem %s7, %s609
        $region48: #{tpu_custom_call.1} parent=23 // pred_fallthru
          _
        // Predicated region
        $region49: #{tpu_custom_call.1} parent=23 // pred_check
          %p611 = pneg %p245
        $region50: #{tpu_custom_call.1} parent=23 // pred_check_branch
          %613 = sbr.rel (%p611) target = $region52
        $region51: #{tpu_custom_call.1} parent=23 // pred_region
          %p614 = scmp.lt.s32.totalorder %s27, 2
          %s615 = scalar_select %p614, %s27, 2
          %s616 = smul.addr %s615, 8
          %s617 = smul.addr %s616, 4
          %s618 = scalar_lea.vmem %s8, %s617
        $region52: #{tpu_custom_call.1} parent=23 // pred_fallthru
          _
        // Predicated region
        $region53: #{tpu_custom_call.1} parent=23 // pred_check
          %p619 = pneg %p271
        $region54: #{tpu_custom_call.1} parent=23 // pred_check_branch
          %621 = sbr.rel (%p619) target = $region56
        $region55: #{tpu_custom_call.1} parent=23 // pred_region
          %p622 = scmp.lt.s32.totalorder %s27, 2
          %s623 = scalar_select %p622, %s27, 2
          %s624 = scalar_lea.vmem %s9, %s623
        $region56: #{tpu_custom_call.1} parent=23 // pred_fallthru
          _
        // Predicated region
        $region57: #{tpu_custom_call.1} parent=23 // pred_check
          %p625 = pneg %p297
        $region58: #{tpu_custom_call.1} parent=23 // pred_check_branch
          %627 = sbr.rel (%p625) target = $region60
        $region59: #{tpu_custom_call.1} parent=23 // pred_region
          %p628 = scmp.lt.s32.totalorder %s27, 2
          %s629 = scalar_select %p628, %s27, 2
          %s630 = smul.addr %s629, 8
          %s631 = smul.addr %s630, 4
          %s632 = scalar_lea.vmem %s10, %s631
        $region60: #{tpu_custom_call.1} parent=23 // pred_fallthru
          _
        // Predicated region
        $region61: #{tpu_custom_call.1} parent=23 // pred_check
          %p633 = pneg %p323
        $region62: #{tpu_custom_call.1} parent=23 // pred_check_branch
          %635 = sbr.rel (%p633) target = $region64
        $region63: #{tpu_custom_call.1} parent=23 // pred_region
          %p636 = scmp.lt.s32.totalorder %s27, 2
          %s637 = scalar_select %p636, %s27, 2
          %s638 = scalar_lea.vmem %s11, %s637
        $region64: #{tpu_custom_call.1} parent=23 // pred_fallthru
          _
        // Predicated region
        $region65: #{tpu_custom_call.1} parent=23 // pred_check
          %p639 = pneg %p349
        $region66: #{tpu_custom_call.1} parent=23 // pred_check_branch
          %641 = sbr.rel (%p639) target = $region68
        $region67: #{tpu_custom_call.1} parent=23 // pred_region
          %p642 = scmp.lt.s32.totalorder %s27, 2
          %s643 = scalar_select %p642, %s27, 2
          %s644 = scalar_lea.vmem %s12, %s643
        $region68: #{tpu_custom_call.1} parent=23 // pred_fallthru
          _
        // Predicated region
        $region69: #{tpu_custom_call.1} parent=23 // pred_check
          %p645 = pneg %p375
        $region70: #{tpu_custom_call.1} parent=23 // pred_check_branch
          %647 = sbr.rel (%p645) target = $region72
        $region71: #{tpu_custom_call.1} parent=23 // pred_region
          %p648 = scmp.lt.s32.totalorder %s27, 2
          %s649 = scalar_select %p648, %s27, 2
          %s650 = scalar_lea.vmem %s13, %s649
        $region72: #{tpu_custom_call.1} parent=23 // pred_fallthru
          _
        // Predicated region
        $region73: #{tpu_custom_call.1} parent=23 // pred_check
          %p651 = pneg %p401
        $region74: #{tpu_custom_call.1} parent=23 // pred_check_branch
          %653 = sbr.rel (%p651) target = $region76
        $region75: #{tpu_custom_call.1} parent=23 // pred_region
          %p654 = scmp.lt.s32.totalorder %s27, 2
          %s655 = scalar_select %p654, %s27, 2
          %s656 = smul.addr %s655, 16
          %s657 = smul.addr %s656, 4
          %s658 = scalar_lea.vmem %s14, %s657
        $region76: #{tpu_custom_call.1} parent=23 // pred_fallthru
          _
        // Predicated region
        $region77: #{tpu_custom_call.1} parent=23 // pred_check
          %p659 = pneg %p427
        $region78: #{tpu_custom_call.1} parent=23 // pred_check_branch
          %661 = sbr.rel (%p659) target = $region80
        $region79: #{tpu_custom_call.1} parent=23 // pred_region
          %p662 = scmp.lt.s32.totalorder %s27, 2
          %s663 = scalar_select %p662, %s27, 2
          %s664 = smul.addr %s663, 2
          %s665 = scalar_lea.vmem %s15, %s664
        $region80: #{tpu_custom_call.1} parent=23 // pred_fallthru
          _
        // Predicated region
        $region81: #{tpu_custom_call.1} parent=23 // pred_check
          %p666 = pneg %p453
        $region82: #{tpu_custom_call.1} parent=23 // pred_check_branch
          %668 = sbr.rel (%p666) target = $region84
        $region83: #{tpu_custom_call.1} parent=23 // pred_region
          %p669 = scmp.lt.s32.totalorder %s27, 2
          %s670 = scalar_select %p669, %s27, 2
          %s671 = smul.addr %s670, 32
          %s672 = smul.addr %s671, 4
          %s673 = scalar_lea.vmem %s16, %s672
        $region84: #{tpu_custom_call.1} parent=23 // pred_fallthru
          _
        // Predicated region
        $region85: #{tpu_custom_call.1} parent=23 // pred_check
          %p674 = pneg %p479
        $region86: #{tpu_custom_call.1} parent=23 // pred_check_branch
          %676 = sbr.rel (%p674) target = $region88
        $region87: #{tpu_custom_call.1} parent=23 // pred_region
          %p677 = scmp.lt.s32.totalorder %s27, 2
          %s678 = scalar_select %p677, %s27, 2
          %s679 = scalar_lea.vmem %s17, %s678
        $region88: #{tpu_custom_call.1} parent=23 // pred_fallthru
          _
      $region24: #{tpu_custom_call.1} parent=5 // pred_fallthru
        _
      %p680 = scmp.le.s32.totalorder 1, %s27
      %p681 = scmp.lt.s32.totalorder %s27, 4
      %p682 = pnand %p680, %p681
      %p683 = pneg %p682
      // Predicated region
      $region89: #{tpu_custom_call.1} parent=5 // pred_check
        _
      $region90: #{tpu_custom_call.1} parent=5 // pred_check_branch
        %685 = sbr.rel (%p682) target = $region92
      $region91: #{tpu_custom_call.1} parent=5 // pred_region
        %s686 = ssub.s32 %s27, 1
        // Predicated region
        $region93: #{tpu_custom_call.1} parent=91 // pred_check
          %p687 = pneg %p48
        $region94: #{tpu_custom_call.1} parent=91 // pred_check_branch
          %689 = sbr.rel (%p687) target = $region96
        $region95: #{tpu_custom_call.1} parent=91 // pred_region
          %690 = dma.done [#allocation3], 64
        $region96: #{tpu_custom_call.1} parent=91 // pred_fallthru
          _
        // Predicated region
        $region97: #{tpu_custom_call.1} parent=91 // pred_check
          %p691 = pneg %p69
        $region98: #{tpu_custom_call.1} parent=91 // pred_check_branch
          %693 = sbr.rel (%p691) target = $region100
        $region99: #{tpu_custom_call.1} parent=91 // pred_region
          %694 = dma.done [#allocation6], 1024
        $region100: #{tpu_custom_call.1} parent=91 // pred_fallthru
          _
        %s695 = sand.u32 %s32, 1
        %s696 = scalar_lea.sflag [#allocation3], %s695
        %s697 = sand.u32 %s82, 1
        %s698 = scalar_lea.vmem [#allocation7], %s697
        // Predicated region
        $region101: #{tpu_custom_call.1} parent=91 // pred_check
          %p699 = pneg %p95
        $region102: #{tpu_custom_call.1} parent=91 // pred_check_branch
          %701 = sbr.rel (%p699) target = $region104
        $region103: #{tpu_custom_call.1} parent=91 // pred_region
          %702 = dma.done %s696, 16
        $region104: #{tpu_custom_call.1} parent=91 // pred_fallthru
          _
        %s703 = sand.u32 %s32, 1
        %s704 = scalar_lea.sflag [#allocation3], %s703
        %s705 = sand.u32 %s108, 1
        %s706 = scalar_lea.vmem [#allocation8], %s705
        // Predicated region
        $region105: #{tpu_custom_call.1} parent=91 // pred_check
          %p707 = pneg %p121
        $region106: #{tpu_custom_call.1} parent=91 // pred_check_branch
          %709 = sbr.rel (%p707) target = $region108
        $region107: #{tpu_custom_call.1} parent=91 // pred_region
          %710 = dma.done %s704, 16
        $region108: #{tpu_custom_call.1} parent=91 // pred_fallthru
          _
        %p711 = pneg %p48
        %p712 = pneg %p45
        %p713 = pneg %p69
        %p714 = pneg %p66
        %s715 = sand.u32 %s32, 1
        %s716 = scalar_lea.sflag [#allocation3], %s715
        %s717 = sand.u32 %s82, 1
        %s718 = scalar_lea.vmem [#allocation7], %s717
        %p719 = pneg %p95
        %p720 = pneg %p92
        %s721 = sand.u32 %s32, 1
        %s722 = scalar_lea.sflag [#allocation3], %s721
        %s723 = sand.u32 %s108, 1
        %s724 = scalar_lea.vmem [#allocation8], %s723
        %p725 = pneg %p121
        %p726 = pneg %p118
        %p727 = scmp.lt.s32.totalorder %s32, 2
        %s728 = scalar_select %p727, %s32, 2
        %s729 = smul.addr %s728, 8
        %s730 = smul.addr %s729, 4
        %s731 = scalar_lea.vmem %s4, %s730
        %p732 = pneg %p147
        %p733 = pneg %p144
        %p734 = scmp.lt.s32.totalorder %s32, 2
        %s735 = scalar_select %p734, %s32, 2
        %s736 = scalar_lea.vmem %s5, %s735
        %p737 = pneg %p173
        %p738 = pneg %p170
        %p739 = scmp.lt.s32.totalorder %s32, 2
        %s740 = scalar_select %p739, %s32, 2
        %s741 = smul.addr %s740, 8
        %s742 = smul.addr %s741, 4
        %s743 = scalar_lea.vmem %s6, %s742
        %p744 = pneg %p199
        %p745 = pneg %p196
        %p746 = scmp.lt.s32.totalorder %s32, 2
        %s747 = scalar_select %p746, %s32, 2
        %s748 = scalar_lea.vmem %s7, %s747
        %p749 = pneg %p225
        %p750 = pneg %p222
        %p751 = scmp.lt.s32.totalorder %s32, 2
        %s752 = scalar_select %p751, %s32, 2
        %s753 = smul.addr %s752, 8
        %s754 = smul.addr %s753, 4
        %s755 = scalar_lea.vmem %s8, %s754
        %p756 = pneg %p251
        %p757 = pneg %p248
        %p758 = scmp.lt.s32.totalorder %s32, 2
        %s759 = scalar_select %p758, %s32, 2
        %s760 = scalar_lea.vmem %s9, %s759
        %p761 = pneg %p277
        %p762 = pneg %p274
        %p763 = scmp.lt.s32.totalorder %s32, 2
        %s764 = scalar_select %p763, %s32, 2
        %s765 = smul.addr %s764, 8
        %s766 = smul.addr %s765, 4
        %s767 = scalar_lea.vmem %s10, %s766
        %p768 = pneg %p303
        %p769 = pneg %p300
        %p770 = scmp.lt.s32.totalorder %s32, 2
        %s771 = scalar_select %p770, %s32, 2
        %s772 = scalar_lea.vmem %s11, %s771
        %p773 = pneg %p329
        %p774 = pneg %p326
        %p775 = scmp.lt.s32.totalorder %s32, 2
        %s776 = scalar_select %p775, %s32, 2
        %s777 = scalar_lea.vmem %s12, %s776
        %p778 = pneg %p355
        %p779 = pneg %p352
        %p780 = scmp.lt.s32.totalorder %s32, 2
        %s781 = scalar_select %p780, %s32, 2
        %s782 = scalar_lea.vmem %s13, %s781
        %p783 = pneg %p381
        %p784 = pneg %p378
        %p785 = scmp.lt.s32.totalorder %s32, 2
        %s786 = scalar_select %p785, %s32, 2
        %s787 = smul.addr %s786, 16
        %s788 = smul.addr %s787, 4
        %s789 = scalar_lea.vmem %s14, %s788
        %p790 = pneg %p407
        %p791 = pneg %p404
        %p792 = scmp.lt.s32.totalorder %s32, 2
        %s793 = scalar_select %p792, %s32, 2
        %s794 = smul.addr %s793, 2
        %s795 = scalar_lea.vmem %s15, %s794
        %p796 = pneg %p433
        %p797 = pneg %p430
        %p798 = scmp.lt.s32.totalorder %s32, 2
        %s799 = scalar_select %p798, %s32, 2
        %s800 = smul.addr %s799, 32
        %s801 = smul.addr %s800, 4
        %s802 = scalar_lea.vmem %s16, %s801
        %p803 = pneg %p459
        %p804 = pneg %p456
        %p805 = scmp.lt.s32.totalorder %s32, 2
        %s806 = scalar_select %p805, %s32, 2
        %s807 = scalar_lea.vmem %s17, %s806
        %p808 = pneg %p485
        %p809 = pneg %p482
        %p810 = pneg %p506
        %p811 = pneg %p503
        %p812 = scmp.lt.s32.totalorder %s32, 2
        %s813 = scalar_select %p812, %s32, 2
        %s814 = smul.addr %s813, 8
        %s815 = smul.addr %s814, 4
        %s816 = scalar_lea.vmem %s4, %s815
        %p817 = scmp.lt.s32.totalorder %s32, 2
        %s818 = scalar_select %p817, %s32, 2
        %s819 = scalar_lea.vmem %s5, %s818
        %p820 = scmp.lt.s32.totalorder %s32, 2
        %s821 = scalar_select %p820, %s32, 2
        %s822 = smul.addr %s821, 8
        %s823 = smul.addr %s822, 4
        %s824 = scalar_lea.vmem %s6, %s823
        %p825 = scmp.lt.s32.totalorder %s32, 2
        %s826 = scalar_select %p825, %s32, 2
        %s827 = scalar_lea.vmem %s7, %s826
        %p828 = scmp.lt.s32.totalorder %s32, 2
        %s829 = scalar_select %p828, %s32, 2
        %s830 = smul.addr %s829, 8
        %s831 = smul.addr %s830, 4
        %s832 = scalar_lea.vmem %s8, %s831
        %p833 = scmp.lt.s32.totalorder %s32, 2
        %s834 = scalar_select %p833, %s32, 2
        %s835 = scalar_lea.vmem %s9, %s834
        %p836 = scmp.lt.s32.totalorder %s32, 2
        %s837 = scalar_select %p836, %s32, 2
        %s838 = smul.addr %s837, 8
        %s839 = smul.addr %s838, 4
        %s840 = scalar_lea.vmem %s10, %s839
        %p841 = scmp.lt.s32.totalorder %s32, 2
        %s842 = scalar_select %p841, %s32, 2
        %s843 = scalar_lea.vmem %s11, %s842
        %p844 = scmp.lt.s32.totalorder %s32, 2
        %s845 = scalar_select %p844, %s32, 2
        %s846 = scalar_lea.vmem %s12, %s845
        %p847 = scmp.lt.s32.totalorder %s32, 2
        %s848 = scalar_select %p847, %s32, 2
        %s849 = scalar_lea.vmem %s13, %s848
        %p850 = scmp.lt.s32.totalorder %s32, 2
        %s851 = scalar_select %p850, %s32, 2
        %s852 = smul.addr %s851, 16
        %s853 = smul.addr %s852, 4
        %s854 = scalar_lea.vmem %s14, %s853
        %p855 = scmp.lt.s32.totalorder %s32, 2
        %s856 = scalar_select %p855, %s32, 2
        %s857 = smul.addr %s856, 2
        %s858 = scalar_lea.vmem %s15, %s857
        %p859 = scmp.lt.s32.totalorder %s32, 2
        %s860 = scalar_select %p859, %s32, 2
        %s861 = smul.addr %s860, 32
        %s862 = smul.addr %s861, 4
        %s863 = scalar_lea.vmem %s16, %s862
        %p864 = scmp.lt.s32.totalorder %s32, 2
        %s865 = scalar_select %p864, %s32, 2
        %s866 = scalar_lea.vmem %s17, %s865
        %p868 = scmp.eq.s32.totalorder %s32, 0
        // Predicated region
        $region109: #{tpu_custom_call.1} parent=91 // pred_check
          %p869 = pneg %p868
        $region110: #{tpu_custom_call.1} parent=91 // pred_check_branch
          %871 = sbr.rel (%p869) target = $region112
        $region111: #{tpu_custom_call.1} parent=91 // pred_region
          %v872 = vld [vmem:[#allocation2] sm:$0xf]
          %vm873 = vcmask 519168
          %874 = vst.msk [vmem:[#allocation9] sm:$0xf] %vm873, %v872
        $region112: #{tpu_custom_call.1} parent=91 // pred_fallthru
          _
        %v875 = vld [vmem:[#allocation9] sm:$0xf]
        %v876 = vld [vmem:[%s698] sm:$0x1]
        %v877 = vld [vmem:[%s706] sm:$0x1]
        %vm878 = vcmask 519168
        %v879 = vsel %vm878, %v875, 0.0
        %880 = vadd.xlane.f32.xlu0 %v879
        %v881 = vpop.xlane.xlu0 %880
        %v882 = vrcp.pop 64.0
        %v883 = vmul.f32 %v881, %v882
        %v884 = vsub.f32 %v875, %v883
        %v885 = vmul.f32 %v884, %v884
        %v886 = vsel %vm878, %v885, 0.0
        %887 = vadd.xlane.f32.xlu0 %v886
        %v888 = vpop.xlane.xlu0 %887
        %v889 = vmul.f32 %v888, 0.015873017
        %v890 = vrsqrt.pop %v889
        %v891 = vmul.f32 %v889, %v890
        %vm892 = vcmp.eq.f32.partialorder %v889, inf
        %v893 = vsel %vm892, %v889, %v891
        %vm894 = vcmp.eq.f32.partialorder %v889, 0.0
        %v895 = vand.u32 %v889, 2147483648
        %v896 = vsel %vm894, %v895, %v893
        %v897 = vadd.f32 %v896, 1e-06
        %v898 = vrcp.pop %v897
        %v900 = vlaneseq
        %v901 = vshrl.u32 %v900, 7
        %v902 = vsub.s32 0, %v901
        %v903 = vrot.slane %v876, %v902
        %v905 = vmul.f32 %v903, %v884
        %v906 = vmul.f32 %v905, %v898
        %v908 = vlaneseq
        %v909 = vshrl.u32 %v908, 7
        %v910 = vsub.s32 0, %v909
        %v911 = vrot.slane %v877, %v910
        %v913 = vadd.f32 %v906, %v911
        %v914 = vpack.c.bf16 %v913, %v913
        %v915 = vld [vmem:[%s816] sm:$0xf]
        %v916 = vld [vmem:[%s816 + $0x4] sm:$0xf]
        %v917 = vld [vmem:[%s816 + $0x8] sm:$0xf]
        %v918 = vld [vmem:[%s816 + $0xc] sm:$0xf]
        %v919 = vld [vmem:[%s816 + $0x10] sm:$0xf]
        %v920 = vld [vmem:[%s816 + $0x14] sm:$0xf]
        %v921 = vld [vmem:[%s816 + $0x18] sm:$0xf]
        %v922 = vld [vmem:[%s816 + $0x1c] sm:$0xf]
        %v923 = vld [vmem:[%s819] sm:$0x1]
        %v925 = vlaneseq
        %v926 = vshrl.u32 %v925, 7
        %v927 = vsub.s32 0, %v926
        %v928 = vrot.slane %v923, %v927
        %v938 = vunpack.c.l.b16 %v915
        %v939 = vunpack.c.l.b16 %v916
        %v940 = vunpack.c.l.b16 %v917
        %v941 = vunpack.c.l.b16 %v918
        %v942 = vunpack.c.l.b16 %v919
        %v943 = vunpack.c.l.b16 %v920
        %v944 = vunpack.c.l.b16 %v921
        %v945 = vunpack.c.l.b16 %v922
        %v946 = vpack.c.b16 %v939, %v938
        %v947 = vpack.c.b16 %v941, %v940
        %v948 = vpack.c.b16 %v943, %v942
        %v949 = vpack.c.b16 %v945, %v944
        %vm954 = vcmask 523264
        %v956 = vsel %vm954, %v914, 0
        %958 = vmatprep.subr.bf16.mxu0 0
        %959 = vmatpush1.bf16.msra.mxu0 %v946
        %960 = vmatprep.subr.bf16.mxu0 0
        %961 = vmatpush1.bf16.msra.mxu0 %v947
        %962 = vmatprep.subr.bf16.mxu0 0
        %963 = vmatpush1.bf16.msra.mxu0 %v948
        %964 = vmatprep.subr.bf16.mxu0 0
        %965 = vmatpush1.bf16.msra.mxu0 %v949
        %966 = vmatprep.subr.bf16.mxu0 0
        %967 = vmatpush1.bf16.msra.mxu0 0
        %968 = vmatprep.subr.bf16.mxu0 0
        %969 = vmatpush1.bf16.msra.mxu0 0
        %970 = vmatprep.subr.bf16.mxu0 0
        %971 = vmatpush1.bf16.msra.mxu0 0
        %972 = vmatprep.subr.bf16.mxu0 0
        %973 = vmatpush1.bf16.msra.mxu0 0
        %974 = vmatprep.subr.bf16.mxu0 0
        %975 = vmatpush1.bf16.msra.mxu0 0
        %976 = vmatprep.subr.bf16.mxu0 0
        %977 = vmatpush1.bf16.msra.mxu0 0
        %978 = vmatprep.subr.bf16.mxu0 0
        %979 = vmatpush1.bf16.msra.mxu0 0
        %980 = vmatprep.subr.bf16.mxu0 0
        %981 = vmatpush1.bf16.msra.mxu0 0
        %982 = vmatprep.subr.bf16.mxu0 0
        %983 = vmatpush1.bf16.msra.mxu0 0
        %984 = vmatprep.subr.bf16.mxu0 0
        %985 = vmatpush1.bf16.msra.mxu0 0
        %986 = vmatprep.subr.bf16.mxu0 0
        %987 = vmatpush1.bf16.msra.mxu0 0
        %988 = vmatprep.subr.bf16.mxu0 0
        %989 = vmatpush1.bf16.msra.mxu0 0
        %990 = vmatprep.mubr.bf16.mxu0 0
        %991 = vmatmul.mubr.bf16.gmra.mrb[0].mxu0 %v956
        %v992 = vpop.f32.mrb[0].mxu0
        %v993 = vadd.f32 %v928, %v992
        %v994 = vpop.f32.mrb[0].mxu0
        %v995 = vpop.f32.mrb[0].mxu0
        %v996 = vpop.f32.mrb[0].mxu0
        %997 = vdwg.mxu0
        %v998 = vld [vmem:[%s824] sm:$0xf]
        %v999 = vld [vmem:[%s824 + $0x4] sm:$0xf]
        %v1000 = vld [vmem:[%s824 + $0x8] sm:$0xf]
        %v1001 = vld [vmem:[%s824 + $0xc] sm:$0xf]
        %v1002 = vld [vmem:[%s824 + $0x10] sm:$0xf]
        %v1003 = vld [vmem:[%s824 + $0x14] sm:$0xf]
        %v1004 = vld [vmem:[%s824 + $0x18] sm:$0xf]
        %v1005 = vld [vmem:[%s824 + $0x1c] sm:$0xf]
        %v1006 = vld [vmem:[%s827] sm:$0x1]
        %v1008 = vlaneseq
        %v1009 = vshrl.u32 %v1008, 7
        %v1010 = vsub.s32 0, %v1009
        %v1011 = vrot.slane %v1006, %v1010
        %v1021 = vunpack.c.l.b16 %v998
        %v1022 = vunpack.c.l.b16 %v999
        %v1023 = vunpack.c.l.b16 %v1000
        %v1024 = vunpack.c.l.b16 %v1001
        %v1025 = vunpack.c.l.b16 %v1002
        %v1026 = vunpack.c.l.b16 %v1003
        %v1027 = vunpack.c.l.b16 %v1004
        %v1028 = vunpack.c.l.b16 %v1005
        %v1029 = vpack.c.b16 %v1022, %v1021
        %v1030 = vpack.c.b16 %v1024, %v1023
        %v1031 = vpack.c.b16 %v1026, %v1025
        %v1032 = vpack.c.b16 %v1028, %v1027
        %1037 = vmatprep.subr.bf16.mxu0 0
        %1038 = vmatpush1.bf16.msra.mxu0 %v1029
        %1039 = vmatprep.subr.bf16.mxu0 0
        %1040 = vmatpush1.bf16.msra.mxu0 %v1030
        %1041 = vmatprep.subr.bf16.mxu0 0
        %1042 = vmatpush1.bf16.msra.mxu0 %v1031
        %1043 = vmatprep.subr.bf16.mxu0 0
        %1044 = vmatpush1.bf16.msra.mxu0 %v1032
        %1045 = vmatprep.subr.bf16.mxu0 0
        %1046 = vmatpush1.bf16.msra.mxu0 0
        %1047 = vmatprep.subr.bf16.mxu0 0
        %1048 = vmatpush1.bf16.msra.mxu0 0
        %1049 = vmatprep.subr.bf16.mxu0 0
        %1050 = vmatpush1.bf16.msra.mxu0 0
        %1051 = vmatprep.subr.bf16.mxu0 0
        %1052 = vmatpush1.bf16.msra.mxu0 0
        %1053 = vmatprep.subr.bf16.mxu0 0
        %1054 = vmatpush1.bf16.msra.mxu0 0
        %1055 = vmatprep.subr.bf16.mxu0 0
        %1056 = vmatpush1.bf16.msra.mxu0 0
        %1057 = vmatprep.subr.bf16.mxu0 0
        %1058 = vmatpush1.bf16.msra.mxu0 0
        %1059 = vmatprep.subr.bf16.mxu0 0
        %1060 = vmatpush1.bf16.msra.mxu0 0
        %1061 = vmatprep.subr.bf16.mxu0 0
        %1062 = vmatpush1.bf16.msra.mxu0 0
        %1063 = vmatprep.subr.bf16.mxu0 0
        %1064 = vmatpush1.bf16.msra.mxu0 0
        %1065 = vmatprep.subr.bf16.mxu0 0
        %1066 = vmatpush1.bf16.msra.mxu0 0
        %1067 = vmatprep.subr.bf16.mxu0 0
        %1068 = vmatpush1.bf16.msra.mxu0 0
        %1069 = vmatprep.mubr.bf16.mxu0 0
        %1070 = vmatmul.mubr.bf16.gmra.mrb[0].mxu0 %v956
        %v1071 = vpop.f32.mrb[0].mxu0
        %v1072 = vadd.f32 %v1011, %v1071
        %v1073 = vpop.f32.mrb[0].mxu0
        %v1074 = vpop.f32.mrb[0].mxu0
        %v1075 = vpop.f32.mrb[0].mxu0
        %1076 = vdwg.mxu0
        %v1077 = vld [vmem:[%s832] sm:$0xf]
        %v1078 = vld [vmem:[%s832 + $0x4] sm:$0xf]
        %v1079 = vld [vmem:[%s832 + $0x8] sm:$0xf]
        %v1080 = vld [vmem:[%s832 + $0xc] sm:$0xf]
        %v1081 = vld [vmem:[%s832 + $0x10] sm:$0xf]
        %v1082 = vld [vmem:[%s832 + $0x14] sm:$0xf]
        %v1083 = vld [vmem:[%s832 + $0x18] sm:$0xf]
        %v1084 = vld [vmem:[%s832 + $0x1c] sm:$0xf]
        %v1085 = vld [vmem:[%s835] sm:$0x1]
        %v1087 = vlaneseq
        %v1088 = vshrl.u32 %v1087, 7
        %v1089 = vsub.s32 0, %v1088
        %v1090 = vrot.slane %v1085, %v1089
        %v1100 = vunpack.c.l.b16 %v1077
        %v1101 = vunpack.c.l.b16 %v1078
        %v1102 = vunpack.c.l.b16 %v1079
        %v1103 = vunpack.c.l.b16 %v1080
        %v1104 = vunpack.c.l.b16 %v1081
        %v1105 = vunpack.c.l.b16 %v1082
        %v1106 = vunpack.c.l.b16 %v1083
        %v1107 = vunpack.c.l.b16 %v1084
        %v1108 = vpack.c.b16 %v1101, %v1100
        %v1109 = vpack.c.b16 %v1103, %v1102
        %v1110 = vpack.c.b16 %v1105, %v1104
        %v1111 = vpack.c.b16 %v1107, %v1106
        %1116 = vmatprep.subr.bf16.mxu0 0
        %1117 = vmatpush1.bf16.msra.mxu0 %v1108
        %1118 = vmatprep.subr.bf16.mxu0 0
        %1119 = vmatpush1.bf16.msra.mxu0 %v1109
        %1120 = vmatprep.subr.bf16.mxu0 0
        %1121 = vmatpush1.bf16.msra.mxu0 %v1110
        %1122 = vmatprep.subr.bf16.mxu0 0
        %1123 = vmatpush1.bf16.msra.mxu0 %v1111
        %1124 = vmatprep.subr.bf16.mxu0 0
        %1125 = vmatpush1.bf16.msra.mxu0 0
        %1126 = vmatprep.subr.bf16.mxu0 0
        %1127 = vmatpush1.bf16.msra.mxu0 0
        %1128 = vmatprep.subr.bf16.mxu0 0
        %1129 = vmatpush1.bf16.msra.mxu0 0
        %1130 = vmatprep.subr.bf16.mxu0 0
        %1131 = vmatpush1.bf16.msra.mxu0 0
        %1132 = vmatprep.subr.bf16.mxu0 0
        %1133 = vmatpush1.bf16.msra.mxu0 0
        %1134 = vmatprep.subr.bf16.mxu0 0
        %1135 = vmatpush1.bf16.msra.mxu0 0
        %1136 = vmatprep.subr.bf16.mxu0 0
        %1137 = vmatpush1.bf16.msra.mxu0 0
        %1138 = vmatprep.subr.bf16.mxu0 0
        %1139 = vmatpush1.bf16.msra.mxu0 0
        %1140 = vmatprep.subr.bf16.mxu0 0
        %1141 = vmatpush1.bf16.msra.mxu0 0
        %1142 = vmatprep.subr.bf16.mxu0 0
        %1143 = vmatpush1.bf16.msra.mxu0 0
        %1144 = vmatprep.subr.bf16.mxu0 0
        %1145 = vmatpush1.bf16.msra.mxu0 0
        %1146 = vmatprep.subr.bf16.mxu0 0
        %1147 = vmatpush1.bf16.msra.mxu0 0
        %1148 = vmatprep.mubr.bf16.mxu0 0
        %1149 = vmatmul.mubr.bf16.gmra.mrb[0].mxu0 %v956
        %v1150 = vpop.f32.mrb[0].mxu0
        %v1151 = vadd.f32 %v1090, %v1150
        %v1152 = vpop.f32.mrb[0].mxu0
        %v1153 = vpop.f32.mrb[0].mxu0
        %v1154 = vpop.f32.mrb[0].mxu0
        %1155 = vdwg.mxu0
        %v1157 = vrot.slane %v1072, 2
        %v1159 = vrot.slane %v1072, 6
        %vm1161 = vcmask 1041408
        %v1162 = vsel %vm1161, %v1157, %v1159
        %v1164 = vrot.slane %v1151, 2
        %v1166 = vrot.slane %v1151, 6
        %v1168 = vsel %vm1161, %v1164, %v1166
        %v1169 = vld [vmem:[#allocation5] sm:$0xff]
        %v1170 = vld [vmem:[#allocation5 + $0x8] sm:$0xff]
        %v1171 = vld [vmem:[#allocation5 + $0x10] sm:$0xff]
        %v1172 = vld [vmem:[#allocation5 + $0x18] sm:$0xff]
        %v1173 = vld [vmem:[#allocation5 + $0x20] sm:$0xff]
        %v1174 = vld [vmem:[#allocation5 + $0x28] sm:$0xff]
        %v1175 = vld [vmem:[#allocation5 + $0x30] sm:$0xff]
        %v1176 = vld [vmem:[#allocation5 + $0x38] sm:$0xff]
        %v1177 = vmul.f32 %v993, %v1072
        %v1179 = vsel %vm954, %v1177, 0
        %1181 = vmatprep.subr.mxu0 0.0
        %1182 = vmatpush1.msra.mxu0 %v1169
        %1183 = vmatprep.subr.mxu0 0.0
        %1184 = vmatpush1.msra.mxu0 %v1170
        %1185 = vmatprep.subr.mxu0 0.0
        %1186 = vmatpush1.msra.mxu0 %v1171
        %1187 = vmatprep.subr.mxu0 0.0
        %1188 = vmatpush1.msra.mxu0 %v1172
        %1189 = vmatprep.subr.mxu0 0.0
        %1190 = vmatpush1.msra.mxu0 %v1173
        %1191 = vmatprep.subr.mxu0 0.0
        %1192 = vmatpush1.msra.mxu0 %v1174
        %1193 = vmatprep.subr.mxu0 0.0
        %1194 = vmatpush1.msra.mxu0 %v1175
        %1195 = vmatprep.subr.mxu0 0.0
        %1196 = vmatpush1.msra.mxu0 %v1176
        %1197 = vmatprep.subr.mxu0 0.0
        %1198 = vmatpush1.msra.mxu0 0.0
        %1199 = vmatprep.subr.mxu0 0.0
        %1200 = vmatpush1.msra.mxu0 0.0
        %1201 = vmatprep.subr.mxu0 0.0
        %1202 = vmatpush1.msra.mxu0 0.0
        %1203 = vmatprep.subr.mxu0 0.0
        %1204 = vmatpush1.msra.mxu0 0.0
        %1205 = vmatprep.subr.mxu0 0.0
        %1206 = vmatpush1.msra.mxu0 0.0
        %1207 = vmatprep.subr.mxu0 0.0
        %1208 = vmatpush1.msra.mxu0 0.0
        %1209 = vmatprep.subr.mxu0 0.0
        %1210 = vmatpush1.msra.mxu0 0.0
        %1211 = vmatprep.subr.mxu0 0.0
        %1212 = vmatpush1.msra.mxu0 0.0
        %1213 = vmatprep.subr.mxu0 0.0
        %1214 = vmatpush1.msra.mxu0 0.0
        %1215 = vmatprep.subr.mxu0 0.0
        %1216 = vmatpush1.msra.mxu0 0.0
        %1217 = vmatprep.subr.mxu0 0.0
        %1218 = vmatpush1.msra.mxu0 0.0
        %1219 = vmatprep.subr.mxu0 0.0
        %1220 = vmatpush1.msra.mxu0 0.0
        %1221 = vmatprep.subr.mxu0 0.0
        %1222 = vmatpush1.msra.mxu0 0.0
        %1223 = vmatprep.subr.mxu0 0.0
        %1224 = vmatpush1.msra.mxu0 0.0
        %1225 = vmatprep.subr.mxu0 0.0
        %1226 = vmatpush1.msra.mxu0 0.0
        %1227 = vmatprep.subr.mxu0 0.0
        %1228 = vmatpush1.msra.mxu0 0.0
        %1229 = vmatprep.subr.mxu0 0.0
        %1230 = vmatpush1.msra.mxu0 0.0
        %1231 = vmatprep.subr.mxu0 0.0
        %1232 = vmatpush1.msra.mxu0 0.0
        %1233 = vmatprep.subr.mxu0 0.0
        %1234 = vmatpush1.msra.mxu0 0.0
        %1235 = vmatprep.subr.mxu0 0.0
        %1236 = vmatpush1.msra.mxu0 0.0
        %1237 = vmatprep.subr.mxu0 0.0
        %1238 = vmatpush1.msra.mxu0 0.0
        %1239 = vmatprep.subr.mxu0 0.0
        %1240 = vmatpush1.msra.mxu0 0.0
        %1241 = vmatprep.subr.mxu0 0.0
        %1242 = vmatpush1.msra.mxu0 0.0
        %1243 = vmatprep.subr.mxu0 0.0
        %1244 = vmatpush1.msra.mxu0 0.0
        %1245 = vmatprep.mubr.f32.mxu0 0.0
        %1246 = vmatmul.mubr.f32.gmra.mrb[0].mxu0 %v1179
        %v1247 = vpop.f32.mrb[0].mxu0
        %v1248 = vadd.f32 0.0, %v1247
        %v1249 = vpop.f32.mrb[0].mxu0
        %1250 = vdwg.mxu0
        %v1251 = vmul.f32 %v993, %v1162
        %v1253 = vsel %vm954, %v1251, 0
        %1255 = vmatprep.subr.mxu0 0.0
        %1256 = vmatpush1.msra.mxu0 %v1169
        %1257 = vmatprep.subr.mxu0 0.0
        %1258 = vmatpush1.msra.mxu0 %v1170
        %1259 = vmatprep.subr.mxu0 0.0
        %1260 = vmatpush1.msra.mxu0 %v1171
        %1261 = vmatprep.subr.mxu0 0.0
        %1262 = vmatpush1.msra.mxu0 %v1172
        %1263 = vmatprep.subr.mxu0 0.0
        %1264 = vmatpush1.msra.mxu0 %v1173
        %1265 = vmatprep.subr.mxu0 0.0
        %1266 = vmatpush1.msra.mxu0 %v1174
        %1267 = vmatprep.subr.mxu0 0.0
        %1268 = vmatpush1.msra.mxu0 %v1175
        %1269 = vmatprep.subr.mxu0 0.0
        %1270 = vmatpush1.msra.mxu0 %v1176
        %1271 = vmatprep.subr.mxu0 0.0
        %1272 = vmatpush1.msra.mxu0 0.0
        %1273 = vmatprep.subr.mxu0 0.0
        %1274 = vmatpush1.msra.mxu0 0.0
        %1275 = vmatprep.subr.mxu0 0.0
        %1276 = vmatpush1.msra.mxu0 0.0
        %1277 = vmatprep.subr.mxu0 0.0
        %1278 = vmatpush1.msra.mxu0 0.0
        %1279 = vmatprep.subr.mxu0 0.0
        %1280 = vmatpush1.msra.mxu0 0.0
        %1281 = vmatprep.subr.mxu0 0.0
        %1282 = vmatpush1.msra.mxu0 0.0
        %1283 = vmatprep.subr.mxu0 0.0
        %1284 = vmatpush1.msra.mxu0 0.0
        %1285 = vmatprep.subr.mxu0 0.0
        %1286 = vmatpush1.msra.mxu0 0.0
        %1287 = vmatprep.subr.mxu0 0.0
        %1288 = vmatpush1.msra.mxu0 0.0
        %1289 = vmatprep.subr.mxu0 0.0
        %1290 = vmatpush1.msra.mxu0 0.0
        %1291 = vmatprep.subr.mxu0 0.0
        %1292 = vmatpush1.msra.mxu0 0.0
        %1293 = vmatprep.subr.mxu0 0.0
        %1294 = vmatpush1.msra.mxu0 0.0
        %1295 = vmatprep.subr.mxu0 0.0
        %1296 = vmatpush1.msra.mxu0 0.0
        %1297 = vmatprep.subr.mxu0 0.0
        %1298 = vmatpush1.msra.mxu0 0.0
        %1299 = vmatprep.subr.mxu0 0.0
        %1300 = vmatpush1.msra.mxu0 0.0
        %1301 = vmatprep.subr.mxu0 0.0
        %1302 = vmatpush1.msra.mxu0 0.0
        %1303 = vmatprep.subr.mxu0 0.0
        %1304 = vmatpush1.msra.mxu0 0.0
        %1305 = vmatprep.subr.mxu0 0.0
        %1306 = vmatpush1.msra.mxu0 0.0
        %1307 = vmatprep.subr.mxu0 0.0
        %1308 = vmatpush1.msra.mxu0 0.0
        %1309 = vmatprep.subr.mxu0 0.0
        %1310 = vmatpush1.msra.mxu0 0.0
        %1311 = vmatprep.subr.mxu0 0.0
        %1312 = vmatpush1.msra.mxu0 0.0
        %1313 = vmatprep.subr.mxu0 0.0
        %1314 = vmatpush1.msra.mxu0 0.0
        %1315 = vmatprep.subr.mxu0 0.0
        %1316 = vmatpush1.msra.mxu0 0.0
        %1317 = vmatprep.subr.mxu0 0.0
        %1318 = vmatpush1.msra.mxu0 0.0
        %1319 = vmatprep.mubr.f32.mxu0 0.0
        %1320 = vmatmul.mubr.f32.gmra.mrb[0].mxu0 %v1253
        %v1321 = vpop.f32.mrb[0].mxu0
        %v1322 = vadd.f32 0.0, %v1321
        %v1323 = vpop.f32.mrb[0].mxu0
        %1324 = vdwg.mxu0
        %v1325 = vmax.f32 %v1248, %v1322
        %v1326 = vsub.f32 %v1248, %v1325
        %v1327 = vmul.f32 %v1326, 1.442695
        %v1328 = vpow.pop %v1327
        %v1329 = vsub.f32 %v1322, %v1325
        %v1330 = vmul.f32 %v1329, 1.442695
        %v1331 = vpow.pop %v1330
        %v1332 = vadd.f32 %v1328, %v1331
        %v1333 = vrcp.pop %v1332
        %v1334 = vmul.f32 %v1328, %v1333
        %v1335 = vmul.f32 %v1334, %v1151
        %v1336 = vmul.f32 %v1331, %v1333
        %v1337 = vmul.f32 %v1336, %v1168
        %v1338 = vadd.f32 %v1335, %v1337
        %v1339 = vpack.c.bf16 %v1338, %v1338
        %v1340 = vld [vmem:[%s840] sm:$0xf]
        %v1341 = vld [vmem:[%s840 + $0x4] sm:$0xf]
        %v1342 = vld [vmem:[%s840 + $0x8] sm:$0xf]
        %v1343 = vld [vmem:[%s840 + $0xc] sm:$0xf]
        %v1344 = vld [vmem:[%s840 + $0x10] sm:$0xf]
        %v1345 = vld [vmem:[%s840 + $0x14] sm:$0xf]
        %v1346 = vld [vmem:[%s840 + $0x18] sm:$0xf]
        %v1347 = vld [vmem:[%s840 + $0x1c] sm:$0xf]
        %v1348 = vld [vmem:[%s843] sm:$0x1]
        %v1350 = vlaneseq
        %v1351 = vshrl.u32 %v1350, 7
        %v1352 = vsub.s32 0, %v1351
        %v1353 = vrot.slane %v1348, %v1352
        %v1363 = vunpack.c.l.b16 %v1340
        %v1364 = vunpack.c.l.b16 %v1341
        %v1365 = vunpack.c.l.b16 %v1342
        %v1366 = vunpack.c.l.b16 %v1343
        %v1367 = vunpack.c.l.b16 %v1344
        %v1368 = vunpack.c.l.b16 %v1345
        %v1369 = vunpack.c.l.b16 %v1346
        %v1370 = vunpack.c.l.b16 %v1347
        %v1371 = vpack.c.b16 %v1364, %v1363
        %v1372 = vpack.c.b16 %v1366, %v1365
        %v1373 = vpack.c.b16 %v1368, %v1367
        %v1374 = vpack.c.b16 %v1370, %v1369
        %v1380 = vsel %vm954, %v1339, 0
        %1382 = vmatprep.subr.bf16.mxu0 0
        %1383 = vmatpush1.bf16.msra.mxu0 %v1371
        %1384 = vmatprep.subr.bf16.mxu0 0
        %1385 = vmatpush1.bf16.msra.mxu0 %v1372
        %1386 = vmatprep.subr.bf16.mxu0 0
        %1387 = vmatpush1.bf16.msra.mxu0 %v1373
        %1388 = vmatprep.subr.bf16.mxu0 0
        %1389 = vmatpush1.bf16.msra.mxu0 %v1374
        %1390 = vmatprep.subr.bf16.mxu0 0
        %1391 = vmatpush1.bf16.msra.mxu0 0
        %1392 = vmatprep.subr.bf16.mxu0 0
        %1393 = vmatpush1.bf16.msra.mxu0 0
        %1394 = vmatprep.subr.bf16.mxu0 0
        %1395 = vmatpush1.bf16.msra.mxu0 0
        %1396 = vmatprep.subr.bf16.mxu0 0
        %1397 = vmatpush1.bf16.msra.mxu0 0
        %1398 = vmatprep.subr.bf16.mxu0 0
        %1399 = vmatpush1.bf16.msra.mxu0 0
        %1400 = vmatprep.subr.bf16.mxu0 0
        %1401 = vmatpush1.bf16.msra.mxu0 0
        %1402 = vmatprep.subr.bf16.mxu0 0
        %1403 = vmatpush1.bf16.msra.mxu0 0
        %1404 = vmatprep.subr.bf16.mxu0 0
        %1405 = vmatpush1.bf16.msra.mxu0 0
        %1406 = vmatprep.subr.bf16.mxu0 0
        %1407 = vmatpush1.bf16.msra.mxu0 0
        %1408 = vmatprep.subr.bf16.mxu0 0
        %1409 = vmatpush1.bf16.msra.mxu0 0
        %1410 = vmatprep.subr.bf16.mxu0 0
        %1411 = vmatpush1.bf16.msra.mxu0 0
        %1412 = vmatprep.subr.bf16.mxu0 0
        %1413 = vmatpush1.bf16.msra.mxu0 0
        %1414 = vmatprep.mubr.bf16.mxu0 0
        %1415 = vmatmul.mubr.bf16.gmra.mrb[0].mxu0 %v1380
        %v1416 = vpop.f32.mrb[0].mxu0
        %v1417 = vadd.f32 %v1353, %v1416
        %v1418 = vpop.f32.mrb[0].mxu0
        %v1419 = vpop.f32.mrb[0].mxu0
        %v1420 = vpop.f32.mrb[0].mxu0
        %1421 = vdwg.mxu0
        %v1422 = vadd.f32 %v875, %v1417
        %v1423 = vld [vmem:[%s846] sm:$0x1]
        %v1424 = vld [vmem:[%s849] sm:$0x1]
        %v1425 = vsel %vm878, %v1422, 0.0
        %1426 = vadd.xlane.f32.xlu0 %v1425
        %v1427 = vpop.xlane.xlu0 %1426
        %v1428 = vmul.f32 %v1427, %v882
        %v1429 = vsub.f32 %v1422, %v1428
        %v1430 = vmul.f32 %v1429, %v1429
        %v1431 = vsel %vm878, %v1430, 0.0
        %1432 = vadd.xlane.f32.xlu0 %v1431
        %v1433 = vpop.xlane.xlu0 %1432
        %v1434 = vmul.f32 %v1433, 0.015873017
        %v1435 = vrsqrt.pop %v1434
        %v1436 = vmul.f32 %v1434, %v1435
        %vm1437 = vcmp.eq.f32.partialorder %v1434, inf
        %v1438 = vsel %vm1437, %v1434, %v1436
        %vm1439 = vcmp.eq.f32.partialorder %v1434, 0.0
        %v1440 = vand.u32 %v1434, 2147483648
        %v1441 = vsel %vm1439, %v1440, %v1438
        %v1442 = vadd.f32 %v1441, 1e-06
        %v1443 = vrcp.pop %v1442
        %v1445 = vlaneseq
        %v1446 = vshrl.u32 %v1445, 7
        %v1447 = vsub.s32 0, %v1446
        %v1448 = vrot.slane %v1423, %v1447
        %v1450 = vmul.f32 %v1448, %v1429
        %v1451 = vmul.f32 %v1450, %v1443
        %v1453 = vlaneseq
        %v1454 = vshrl.u32 %v1453, 7
        %v1455 = vsub.s32 0, %v1454
        %v1456 = vrot.slane %v1424, %v1455
        %v1458 = vadd.f32 %v1451, %v1456
        %v1459 = vpack.c.bf16 %v1458, %v1458
        %v1460 = vld [vmem:[%s854] sm:$0xff]
        %v1461 = vld [vmem:[%s854 + $0x8] sm:$0xff]
        %v1462 = vld [vmem:[%s854 + $0x10] sm:$0xff]
        %v1463 = vld [vmem:[%s854 + $0x18] sm:$0xff]
        %v1464 = vld [vmem:[%s854 + $0x20] sm:$0xff]
        %v1465 = vld [vmem:[%s854 + $0x28] sm:$0xff]
        %v1466 = vld [vmem:[%s854 + $0x30] sm:$0xff]
        %v1467 = vld [vmem:[%s854 + $0x38] sm:$0xff]
        %v1468 = vld [vmem:[%s858] sm:$0x3]
        %v1470 = vlaneseq
        %v1471 = vshrl.u32 %v1470, 7
        %v1472 = vsub.s32 0, %v1471
        %v1473 = vrot.slane %v1468, %v1472
        %v1474 = vlaneseq
        %v1475 = vshrl.u32 %v1474, 7
        %v1476 = vsub.s32 1, %v1475
        %v1477 = vrot.slane %v1468, %v1476
        %v1488 = vunpack.c.l.b16 %v1460
        %v1489 = vunpack.c.h.b16 %v1460
        %v1490 = vunpack.c.l.b16 %v1461
        %v1491 = vunpack.c.h.b16 %v1461
        %v1492 = vunpack.c.l.b16 %v1462
        %v1493 = vunpack.c.h.b16 %v1462
        %v1494 = vunpack.c.l.b16 %v1463
        %v1495 = vunpack.c.h.b16 %v1463
        %v1496 = vunpack.c.l.b16 %v1464
        %v1497 = vunpack.c.h.b16 %v1464
        %v1498 = vunpack.c.l.b16 %v1465
        %v1499 = vunpack.c.h.b16 %v1465
        %v1500 = vunpack.c.l.b16 %v1466
        %v1501 = vunpack.c.h.b16 %v1466
        %v1502 = vunpack.c.l.b16 %v1467
        %v1503 = vunpack.c.h.b16 %v1467
        %v1504 = vpack.c.b16 %v1490, %v1488
        %v1505 = vpack.c.b16 %v1491, %v1489
        %v1506 = vpack.c.b16 %v1494, %v1492
        %v1507 = vpack.c.b16 %v1495, %v1493
        %v1508 = vpack.c.b16 %v1498, %v1496
        %v1509 = vpack.c.b16 %v1499, %v1497
        %v1510 = vpack.c.b16 %v1502, %v1500
        %v1511 = vpack.c.b16 %v1503, %v1501
        %v1521 = vsel %vm954, %v1459, 0
        %1523 = vmatprep.subr.bf16.mxu0 %v1505
        %1524 = vmatpush1.bf16.msra.mxu0 %v1504
        %1525 = vmatprep.subr.bf16.mxu0 %v1507
        %1526 = vmatpush1.bf16.msra.mxu0 %v1506
        %1527 = vmatprep.subr.bf16.mxu0 %v1509
        %1528 = vmatpush1.bf16.msra.mxu0 %v1508
        %1529 = vmatprep.subr.bf16.mxu0 %v1511
        %1530 = vmatpush1.bf16.msra.mxu0 %v1510
        %1531 = vmatprep.subr.bf16.mxu0 0
        %1532 = vmatpush1.bf16.msra.mxu0 0
        %1533 = vmatprep.subr.bf16.mxu0 0
        %1534 = vmatpush1.bf16.msra.mxu0 0
        %1535 = vmatprep.subr.bf16.mxu0 0
        %1536 = vmatpush1.bf16.msra.mxu0 0
        %1537 = vmatprep.subr.bf16.mxu0 0
        %1538 = vmatpush1.bf16.msra.mxu0 0
        %1539 = vmatprep.subr.bf16.mxu0 0
        %1540 = vmatpush1.bf16.msra.mxu0 0
        %1541 = vmatprep.subr.bf16.mxu0 0
        %1542 = vmatpush1.bf16.msra.mxu0 0
        %1543 = vmatprep.subr.bf16.mxu0 0
        %1544 = vmatpush1.bf16.msra.mxu0 0
        %1545 = vmatprep.subr.bf16.mxu0 0
        %1546 = vmatpush1.bf16.msra.mxu0 0
        %1547 = vmatprep.subr.bf16.mxu0 0
        %1548 = vmatpush1.bf16.msra.mxu0 0
        %1549 = vmatprep.subr.bf16.mxu0 0
        %1550 = vmatpush1.bf16.msra.mxu0 0
        %1551 = vmatprep.subr.bf16.mxu0 0
        %1552 = vmatpush1.bf16.msra.mxu0 0
        %1553 = vmatprep.subr.bf16.mxu0 0
        %1554 = vmatpush1.bf16.msra.mxu0 0
        %1555 = vmatprep.mubr.bf16.mxu0 0
        %1556 = vmatmul.mubr.bf16.gmra.mrb[0].mxu0 %v1521
        %v1557 = vpop.f32.mrb[0].mxu0
        %v1558 = vadd.f32 %v1473, %v1557
        %v1559 = vpop.f32.mrb[0].mxu0
        %v1560 = vadd.f32 %v1477, %v1559
        %v1561 = vpop.f32.mrb[0].mxu0
        %v1562 = vpop.f32.mrb[0].mxu0
        %1563 = vdwg.mxu0
        %v1564 = vmul.f32 %v1558, 0.5
        %v1565 = vmul.f32 %v1560, 0.5
        %v1566 = vmul.f32 %v1558, 0.044715
        %v1567 = vmul.f32 %v1560, 0.044715
        %v1568 = vmul.f32 %v1566, %v1558
        %v1569 = vmul.f32 %v1567, %v1560
        %v1570 = vmul.f32 %v1568, %v1558
        %v1571 = vmul.f32 %v1569, %v1560
        %v1572 = vadd.f32 %v1558, %v1570
        %v1573 = vadd.f32 %v1560, %v1571
        %v1574 = vmul.f32 %v1572, 0.7978846
        %v1575 = vmul.f32 %v1573, 0.7978846
        %v1576 = vtanh.pop %v1574
        %v1577 = vtanh.pop %v1575
        %v1578 = vadd.f32 %v1576, 1.0
        %v1579 = vadd.f32 %v1577, 1.0
        %v1580 = vmul.f32 %v1564, %v1578
        %v1581 = vmul.f32 %v1565, %v1579
        %v1582 = vpack.c.bf16 %v1580, %v1580
        %v1583 = vpack.c.bf16 %v1581, %v1581
        %v1584 = vld [vmem:[%s863] sm:$0xf]
        %v1585 = vld [vmem:[%s863 + $0x4] sm:$0xf]
        %v1586 = vld [vmem:[%s863 + $0x8] sm:$0xf]
        %v1587 = vld [vmem:[%s863 + $0xc] sm:$0xf]
        %v1588 = vld [vmem:[%s863 + $0x10] sm:$0xf]
        %v1589 = vld [vmem:[%s863 + $0x14] sm:$0xf]
        %v1590 = vld [vmem:[%s863 + $0x18] sm:$0xf]
        %v1591 = vld [vmem:[%s863 + $0x1c] sm:$0xf]
        %v1592 = vld [vmem:[%s863 + $0x20] sm:$0xf]
        %v1593 = vld [vmem:[%s863 + $0x24] sm:$0xf]
        %v1594 = vld [vmem:[%s863 + $0x28] sm:$0xf]
        %v1595 = vld [vmem:[%s863 + $0x2c] sm:$0xf]
        %v1596 = vld [vmem:[%s863 + $0x30] sm:$0xf]
        %v1597 = vld [vmem:[%s863 + $0x34] sm:$0xf]
        %v1598 = vld [vmem:[%s863 + $0x38] sm:$0xf]
        %v1599 = vld [vmem:[%s863 + $0x3c] sm:$0xf]
        %v1600 = vld [vmem:[%s863 + $0x40] sm:$0xf]
        %v1601 = vld [vmem:[%s863 + $0x44] sm:$0xf]
        %v1602 = vld [vmem:[%s863 + $0x48] sm:$0xf]
        %v1603 = vld [vmem:[%s863 + $0x4c] sm:$0xf]
        %v1604 = vld [vmem:[%s863 + $0x50] sm:$0xf]
        %v1605 = vld [vmem:[%s863 + $0x54] sm:$0xf]
        %v1606 = vld [vmem:[%s863 + $0x58] sm:$0xf]
        %v1607 = vld [vmem:[%s863 + $0x5c] sm:$0xf]
        %v1608 = vld [vmem:[%s863 + $0x60] sm:$0xf]
        %v1609 = vld [vmem:[%s863 + $0x64] sm:$0xf]
        %v1610 = vld [vmem:[%s863 + $0x68] sm:$0xf]
        %v1611 = vld [vmem:[%s863 + $0x6c] sm:$0xf]
        %v1612 = vld [vmem:[%s863 + $0x70] sm:$0xf]
        %v1613 = vld [vmem:[%s863 + $0x74] sm:$0xf]
        %v1614 = vld [vmem:[%s863 + $0x78] sm:$0xf]
        %v1615 = vld [vmem:[%s863 + $0x7c] sm:$0xf]
        %v1616 = vld [vmem:[%s866] sm:$0x1]
        %v1618 = vlaneseq
        %v1619 = vshrl.u32 %v1618, 7
        %v1620 = vsub.s32 0, %v1619
        %v1621 = vrot.slane %v1616, %v1620
        %v1655 = vunpack.c.l.b16 %v1584
        %v1656 = vunpack.c.l.b16 %v1585
        %v1657 = vunpack.c.l.b16 %v1586
        %v1658 = vunpack.c.l.b16 %v1587
        %v1659 = vunpack.c.l.b16 %v1588
        %v1660 = vunpack.c.l.b16 %v1589
        %v1661 = vunpack.c.l.b16 %v1590
        %v1662 = vunpack.c.l.b16 %v1591
        %v1663 = vunpack.c.l.b16 %v1592
        %v1664 = vunpack.c.l.b16 %v1593
        %v1665 = vunpack.c.l.b16 %v1594
        %v1666 = vunpack.c.l.b16 %v1595
        %v1667 = vunpack.c.l.b16 %v1596
        %v1668 = vunpack.c.l.b16 %v1597
        %v1669 = vunpack.c.l.b16 %v1598
        %v1670 = vunpack.c.l.b16 %v1599
        %v1671 = vunpack.c.l.b16 %v1600
        %v1672 = vunpack.c.l.b16 %v1601
        %v1673 = vunpack.c.l.b16 %v1602
        %v1674 = vunpack.c.l.b16 %v1603
        %v1675 = vunpack.c.l.b16 %v1604
        %v1676 = vunpack.c.l.b16 %v1605
        %v1677 = vunpack.c.l.b16 %v1606
        %v1678 = vunpack.c.l.b16 %v1607
        %v1679 = vunpack.c.l.b16 %v1608
        %v1680 = vunpack.c.l.b16 %v1609
        %v1681 = vunpack.c.l.b16 %v1610
        %v1682 = vunpack.c.l.b16 %v1611
        %v1683 = vunpack.c.l.b16 %v1612
        %v1684 = vunpack.c.l.b16 %v1613
        %v1685 = vunpack.c.l.b16 %v1614
        %v1686 = vunpack.c.l.b16 %v1615
        %v1687 = vpack.c.b16 %v1656, %v1655
        %v1688 = vpack.c.b16 %v1658, %v1657
        %v1689 = vpack.c.b16 %v1660, %v1659
        %v1690 = vpack.c.b16 %v1662, %v1661
        %v1691 = vpack.c.b16 %v1664, %v1663
        %v1692 = vpack.c.b16 %v1666, %v1665
        %v1693 = vpack.c.b16 %v1668, %v1667
        %v1694 = vpack.c.b16 %v1670, %v1669
        %v1695 = vpack.c.b16 %v1672, %v1671
        %v1696 = vpack.c.b16 %v1674, %v1673
        %v1697 = vpack.c.b16 %v1676, %v1675
        %v1698 = vpack.c.b16 %v1678, %v1677
        %v1699 = vpack.c.b16 %v1680, %v1679
        %v1700 = vpack.c.b16 %v1682, %v1681
        %v1701 = vpack.c.b16 %v1684, %v1683
        %v1702 = vpack.c.b16 %v1686, %v1685
        %1719 = vmatprep.subr.bf16.mxu0 0
        %1720 = vmatpush1.bf16.msra.mxu0 %v1687
        %1721 = vmatprep.subr.bf16.mxu0 0
        %1722 = vmatpush1.bf16.msra.mxu0 %v1688
        %1723 = vmatprep.subr.bf16.mxu0 0
        %1724 = vmatpush1.bf16.msra.mxu0 %v1689
        %1725 = vmatprep.subr.bf16.mxu0 0
        %1726 = vmatpush1.bf16.msra.mxu0 %v1690
        %1727 = vmatprep.subr.bf16.mxu0 0
        %1728 = vmatpush1.bf16.msra.mxu0 %v1691
        %1729 = vmatprep.subr.bf16.mxu0 0
        %1730 = vmatpush1.bf16.msra.mxu0 %v1692
        %1731 = vmatprep.subr.bf16.mxu0 0
        %1732 = vmatpush1.bf16.msra.mxu0 %v1693
        %1733 = vmatprep.subr.bf16.mxu0 0
        %1734 = vmatpush1.bf16.msra.mxu0 %v1694
        %1735 = vmatprep.subr.bf16.mxu0 0
        %1736 = vmatpush1.bf16.msra.mxu0 %v1695
        %1737 = vmatprep.subr.bf16.mxu0 0
        %1738 = vmatpush1.bf16.msra.mxu0 %v1696
        %1739 = vmatprep.subr.bf16.mxu0 0
        %1740 = vmatpush1.bf16.msra.mxu0 %v1697
        %1741 = vmatprep.subr.bf16.mxu0 0
        %1742 = vmatpush1.bf16.msra.mxu0 %v1698
        %1743 = vmatprep.subr.bf16.mxu0 0
        %1744 = vmatpush1.bf16.msra.mxu0 %v1699
        %1745 = vmatprep.subr.bf16.mxu0 0
        %1746 = vmatpush1.bf16.msra.mxu0 %v1700
        %1747 = vmatprep.subr.bf16.mxu0 0
        %1748 = vmatpush1.bf16.msra.mxu0 %v1701
        %1749 = vmatprep.subr.bf16.mxu0 0
        %1750 = vmatpush1.bf16.msra.mxu0 %v1702
        %1751 = vmatprep.mubr.bf16.mxu0 %v1583
        %1752 = vmatmul.mubr.bf16.gmra.mrb[0].mxu0 %v1582
        %v1753 = vpop.f32.mrb[0].mxu0
        %v1754 = vadd.f32 %v1621, %v1753
        %v1755 = vpop.f32.mrb[0].mxu0
        %v1756 = vpop.f32.mrb[0].mxu0
        %v1757 = vpop.f32.mrb[0].mxu0
        %1758 = vdwg.mxu0
        %v1759 = vadd.f32 %v1422, %v1754
        %1760 = vst.msk [vmem:[#allocation9] sm:$0xf] %vm878, %v1759
        // Predicated region
        $region113: #{tpu_custom_call.1} parent=91 // pred_check
          %p1761 = pneg %p503
        $region114: #{tpu_custom_call.1} parent=91 // pred_check_branch
          %1763 = sbr.rel (%p1761) target = $region116
        $region115: #{tpu_custom_call.1} parent=91 // pred_region
          %s1765 = ssub.s32 64, 64
          %1766 = vsyncadd [#allocation4], %s1765
          %s1768 = sshll.u32 [#allocation9], 4
          %s1769 = int_to_ptr.vmem [resolvable:$true] %s1768
          %1771 = dma.vmem_to_hbm [thread:$0]  %s1769, 64, %s18, [#allocation4]
        $region116: #{tpu_custom_call.1} parent=91 // pred_fallthru
          _
        // Predicated region
        $region117: #{tpu_custom_call.1} parent=91 // pred_check
          %p1772 = pneg %p503
        $region118: #{tpu_custom_call.1} parent=91 // pred_check_branch
          %1774 = sbr.rel (%p1772) target = $region120
        $region119: #{tpu_custom_call.1} parent=91 // pred_region
          %1775 = dma.done [#allocation4], 64
        $region120: #{tpu_custom_call.1} parent=91 // pred_fallthru
          _
      $region92: #{tpu_custom_call.1} parent=5 // pred_fallthru
        _
      %p1776 = scmp.le.s32.totalorder 2, %s27
      // Predicated region
      $region121: #{tpu_custom_call.1} parent=5 // pred_check
        %p1777 = pneg %p1776
      $region122: #{tpu_custom_call.1} parent=5 // pred_check_branch
        %1779 = sbr.rel (%p1777) target = $region124
      $region123: #{tpu_custom_call.1} parent=5 // pred_region
        %s1780 = ssub.s32 %s27, 2
      $region124: #{tpu_custom_call.1} parent=5 // pred_fallthru
        _
    $region6: #{tpu_custom_call.1} parent=1 // loop_footer
      %s31 = sadd.s32 1, %s27
    $region7: #{tpu_custom_call.1} parent=1 // loop_footer_branch
      %26 = sbr.rel target = $region3
    $region8: #{tpu_custom_call.1} parent=1 // loop_exit
      _
    %1781 = vsyncpa [#allocation3], 1
    %s1782 = scalar_lea.sflag [#allocation3], 1
    %1783 = vsyncpa %s1782, 1
    %1784 = vsyncpa [#allocation6], 1
    %1785 = vsyncpa [#allocation4], 1
    %s1786 = scalar_lea.sflag [#allocation4], 1
    %1787 = vsyncpa %s1786, 1

</llo_original>
